<compile_context>
chip_gen: v7x
topology: tpu7x:2x2x1
jax: 0.10.0
libtpu: 0.0.40
codegen_flags: <defaults>
</compile_context>

<pallas_src>
import functools

import jax
import jax.numpy as jnp
from jax.experimental import pallas as pl
from jax.experimental.pallas import tpu as pltpu


# --------------------------------- kernel -----------------------------------

def resnet_block_kernel(x_ref, w1_ref, w2_ref, o_ref, *, c, h, w, eps):
    """Fused ResnetBlock forward for one sample (grid is over batch).

    x_ref  : (1, C, H*W)   lane-dense input, f32 (conv input AND residual)
    w1_ref : (9, C, C)     conv1 weight, tap-major (kh*3+kw, Cout, Cin), bf16
    w2_ref : (9, C, C)     conv2 weight, same layout, bf16
    o_ref  : (1, C, H*W)   lane-dense output
    """
    hw = h * w

    # Lane-index masks for the reflect(1) boundary fix-ups (built once).
    lane = jax.lax.broadcasted_iota(jnp.int32, (1, hw), 1)
    col = lane % w
    first_row = lane < w
    last_row = lane >= hw - w
    first_col = col == 0
    last_col = col == w - 1

    def conv3x3_reflect(a, w_ref):
        # a: (C, H*W) f32.  Shift-and-accumulate 3x3 conv with reflect(1) pad:
        # 9 taps via lane rolls + jnp.where at the image border, 9 K=C matmuls
        # into one f32 accumulator.  No im2col buffer is materialised; only the
        # 3 row-shifted tensors and one column tap are live at a time.
        nxt = pltpu.roll(a, hw - w, axis=1)          # value at row i+1 (wraps)
        prv = pltpu.roll(a, w, axis=1)               # value at row i-1 (wraps)
        rows = (
            jnp.where(first_row, nxt, prv),          # kh=0: row i-1, reflect top
            a,                                       # kh=1: row i
            jnp.where(last_row, prv, nxt),           # kh=2: row i+1, reflect bottom
        )
        acc = jnp.zeros((c, hw), jnp.float32)
        for kh in range(3):
            r = rows[kh]
            west = pltpu.roll(r, 1, axis=1)          # value at col j-1 (wraps)
            east = pltpu.roll(r, hw - 1, axis=1)     # value at col j+1 (wraps)
            taps = (
                jnp.where(first_col, east, west),    # kw=0: col j-1, reflect left
                r,                                   # kw=1: col j
                jnp.where(last_col, west, east),     # kw=2: col j+1, reflect right
            )
            for kw in range(3):
                acc += jnp.dot(w_ref[kh * 3 + kw],
                               taps[kw].astype(jnp.bfloat16),
                               preferred_element_type=jnp.float32)
        return acc

    def inst_norm(a):
        # InstanceNorm2d(affine=False): fused single-pass statistics
        # (var = E[a^2] - mean^2), per channel over the spatial (lane) axis.
        inv_hw = 1.0 / hw
        mean = jnp.sum(a, axis=1, keepdims=True) * inv_hw
        msq = jnp.sum(a * a, axis=1, keepdims=True) * inv_hw
        var = msq - mean * mean
        return (a - mean) * jax.lax.rsqrt(var + eps)

    x = x_ref[0]                                     # (C, H*W) f32

    # conv1 -> instance norm -> ReLU   (the conv bias is cancelled by the norm)
    y = jnp.maximum(inst_norm(conv3x3_reflect(x, w1_ref)), 0.0)

    # conv2 -> instance norm
    z = inst_norm(conv3x3_reflect(y, w2_ref))

    # residual add, lane-dense store
    o_ref[0] = (x + z).astype(o_ref.dtype)


# --------------------------------- wrapper -----------------------------------

def resnet_block_forward(x, w1, b1, w2, b2, *, eps=1e-5):
    """x: (N,C,H,W) f32; w*: (C,C,3,3) OIHW; b*: (C,). Returns (N,C,H,W).

    b1/b2 are accepted for API parity with the PyTorch module but are not sent
    to the kernel: a per-channel bias added right before
    InstanceNorm2d(affine=False) is exactly removed by the mean subtraction,
    so it has no effect on the output (exact simplification, not an approx).
    """
    n, c, h, w = x.shape
    hw = h * w
    del b1, b2  # cancelled exactly by the instance norm

    # NOTE: H*W should be a multiple of 128 for an unmasked lane-dense store
    # (true for the generator's feature maps, e.g. 16x16=256).  The kernel is
    # correct either way; only the store becomes masked otherwise.

    # ---- trace-time layout folding (plain JAX, runs once under jit) ----
    x_flat = x.reshape(n, c, hw)                                   # lane-dense
    w1m = jnp.transpose(w1, (2, 3, 0, 1)).reshape(9, c, c).astype(jnp.bfloat16)
    w2m = jnp.transpose(w2, (2, 3, 0, 1)).reshape(9, c, c).astype(jnp.bfloat16)

    kernel = functools.partial(resnet_block_kernel, c=c, h=h, w=w, eps=eps)

    flops = n * 2 * (2 * c * (9 * c) * hw)                         # two convs
    bytes_accessed = 2 * x_flat.size * 4 + (w1m.size + w2m.size) * 2

    out = pl.pallas_call(
        kernel,
        out_shape=jax.ShapeDtypeStruct((n, c, hw), x.dtype),
        grid_spec=pltpu.PrefetchScalarGridSpec(
            num_scalar_prefetch=0,
            grid=(n,),                                             # sample/step
            in_specs=[
                pl.BlockSpec((1, c, hw), lambda i: (i, 0, 0)),     # x (one stream)
                pl.BlockSpec((9, c, c), lambda i: (0, 0, 0)),      # w1 (invariant)
                pl.BlockSpec((9, c, c), lambda i: (0, 0, 0)),      # w2 (invariant)
            ],
            out_specs=pl.BlockSpec((1, c, hw), lambda i: (i, 0, 0)),
        ),
        compiler_params=pltpu.CompilerParams(
            dimension_semantics=("parallel",)),
        cost_estimate=pl.CostEstimate(
            flops=flops,
            transcendentals=2 * n * c,                             # rsqrt per norm/ch
            bytes_accessed=bytes_accessed),
    )(x_flat, w1m, w2m)

    return out.reshape(n, c, h, w)


# ------------------------------ reference (JAX) -------------------------------

def resnet_block_reference(x, w1, b1, w2, b2, *, eps=1e-5):
    """Pure-JAX f32 reference matching the PyTorch forward (biases included)."""
    def conv3x3_reflect(a, wgt, bias):
        a_pad = jnp.pad(a, ((0, 0), (0, 0), (1, 1), (1, 1)), mode="reflect")
        y = jax.lax.conv_general_dilated(
            a_pad, wgt, window_strides=(1, 1), padding="VALID",
            dimension_numbers=("NCHW", "OIHW", "NCHW"),
            precision=jax.lax.Precision.HIGHEST)
        return y + bias[None, :, None, None]

    def inorm(a):
        mean = jnp.mean(a, axis=(2, 3), keepdims=True)
        var = jnp.mean((a - mean) ** 2, axis=(2, 3), keepdims=True)
        return (a - mean) * jax.lax.rsqrt(var + eps)

    y = jnp.maximum(inorm(conv3x3_reflect(x, w1, b1)), 0.0)
    z = inorm(conv3x3_reflect(y, w2, b2))
    return x + z


# ---------------------------------- main --------------------------------------

if __name__ == "__main__":
    key = jax.random.PRNGKey(0)
    k_x, k_w1, k_b1, k_w2, k_b2 = jax.random.split(key, 5)

    N, DIM, H, W = 2, 4, 16, 16

    x = jax.random.normal(k_x, (N, DIM, H, W), jnp.float32)
    w1 = 0.02 * jax.random.normal(k_w1, (DIM, DIM, 3, 3), jnp.float32)
    b1 = 0.02 * jax.random.normal(k_b1, (DIM,), jnp.float32)
    w2 = 0.02 * jax.random.normal(k_w2, (DIM, DIM, 3, 3), jnp.float32)
    b2 = 0.02 * jax.random.normal(k_b2, (DIM,), jnp.float32)

    out = jax.block_until_ready(resnet_block_forward(x, w1, b1, w2, b2))
    ref = jax.block_until_ready(resnet_block_reference(x, w1, b1, w2, b2))

    assert out.shape == (N, DIM, H, W), out.shape
    # bf16 MXU operands with f32 accumulation -> relaxed tolerance vs f32 HIGHEST.
    assert jnp.allclose(out, ref, atol=5e-2, rtol=5e-2), \
        float(jnp.max(jnp.abs(out - ref)))

    print("KERNEL_OK")
</pallas_src>

<mosaic_0001>
module attributes {stable_mosaic.version = 11 : i64} {
  func.func @resnet_block_kernel(%arg0: i32, %arg1: memref<1x4x256xf32, #tpu.memory_space<vmem>>, %arg2: memref<9x4x4xbf16, #tpu.memory_space<vmem>>, %arg3: memref<9x4x4xbf16, #tpu.memory_space<vmem>>, %arg4: memref<1x4x256xf32, #tpu.memory_space<vmem>>) attributes {dimension_semantics = [#tpu.dimension_semantics<parallel>], iteration_bounds = array<i64: 2>, scalar_prefetch = 0 : i64, scratch_operands = 0 : i64, tpu.core_type = #tpu.core_type<tc>, window_params = [{transform_indices = @transform_0, window_bounds = array<i64: 1, 4, 256>}, {pipeline_mode = #tpu.pipeline_mode<synchronous>, transform_indices = @transform_1, window_bounds = array<i64: 9, 4, 4>}, {pipeline_mode = #tpu.pipeline_mode<synchronous>, transform_indices = @transform_2, window_bounds = array<i64: 9, 4, 4>}, {transform_indices = @transform_3, window_bounds = array<i64: 1, 4, 256>}]} {
    %0 = tpu.iota {dimensions = array<i32: 1>} : vector<1x256xi32>
    %c16_i32 = arith.constant 16 : i32
    %c0_i32 = arith.constant 0 : i32
    %1 = arith.cmpi eq, %c16_i32, %c0_i32 : i32
    %c1_i32 = arith.constant 1 : i32
    %2 = arith.select %1, %c1_i32, %c16_i32 : i32
    %3 = vector.broadcast %2 : i32 to vector<1x256xi32>
    %4 = arith.remsi %0, %3 : vector<1x256xi32>
    %c0_i32_0 = arith.constant 0 : i32
    %5 = vector.broadcast %c0_i32_0 : i32 to vector<1x256xi32>
    %6 = arith.cmpi ne, %4, %5 : vector<1x256xi32>
    %c0_i32_1 = arith.constant 0 : i32
    %7 = vector.broadcast %c0_i32_1 : i32 to vector<1x256xi32>
    %8 = arith.cmpi slt, %4, %7 : vector<1x256xi32>
    %c0_i32_2 = arith.constant 0 : i32
    %9 = arith.cmpi slt, %2, %c0_i32_2 : i32
    %10 = vector.broadcast %9 : i1 to vector<1x256xi1>
    %11 = vector.broadcast %10 : vector<1x256xi1> to vector<1x256xi1>
    %12 = arith.xori %8, %11 : vector<1x256xi1>
    %13 = arith.andi %12, %6 : vector<1x256xi1>
    %14 = vector.broadcast %2 : i32 to vector<1x256xi32>
    %15 = arith.addi %4, %14 : vector<1x256xi32>
    %16 = arith.select %13, %15, %4 : vector<1x256xi1>, vector<1x256xi32>
    %c16_i32_3 = arith.constant 16 : i32
    %17 = vector.broadcast %c16_i32_3 : i32 to vector<1x256xi32>
    %18 = arith.cmpi slt, %0, %17 : vector<1x256xi32>
    %c240_i32 = arith.constant 240 : i32
    %19 = vector.broadcast %c240_i32 : i32 to vector<1x256xi32>
    %20 = arith.cmpi sge, %0, %19 : vector<1x256xi32>
    %c0_i32_4 = arith.constant 0 : i32
    %21 = vector.broadcast %c0_i32_4 : i32 to vector<1x256xi32>
    %22 = arith.cmpi eq, %16, %21 : vector<1x256xi32>
    %c15_i32 = arith.constant 15 : i32
    %23 = vector.broadcast %c15_i32 : i32 to vector<1x256xi32>
    %24 = arith.cmpi eq, %16, %23 : vector<1x256xi32>
    %c0 = arith.constant 0 : index
    %c0_5 = arith.constant 0 : index
    %c0_6 = arith.constant 0 : index
    %25 = vector.load %arg1[%c0, %c0_5, %c0_6] : memref<1x4x256xf32, #tpu.memory_space<vmem>>, vector<1x4x256xf32>
    %26 = vector.shape_cast %25 : vector<1x4x256xf32> to vector<4x256xf32>
    %c240_i32_7 = arith.constant 240 : i32
    %27 = tpu.dynamic_rotate %26 by %c240_i32_7 dim 1 : vector<4x256xf32>, i32 -> vector<4x256xf32>
    %c16_i32_8 = arith.constant 16 : i32
    %28 = tpu.dynamic_rotate %26 by %c16_i32_8 dim 1 : vector<4x256xf32>, i32 -> vector<4x256xf32>
    %29 = vector.shape_cast %18 : vector<1x256xi1> to vector<1x256xi1>
    %30 = vector.broadcast %29 : vector<1x256xi1> to vector<4x256xi1>
    %31 = arith.select %30, %27, %28 : vector<4x256xi1>, vector<4x256xf32>
    %32 = vector.shape_cast %20 : vector<1x256xi1> to vector<1x256xi1>
    %33 = vector.broadcast %32 : vector<1x256xi1> to vector<4x256xi1>
    %34 = arith.select %33, %28, %27 : vector<4x256xi1>, vector<4x256xf32>
    %cst = arith.constant 0.000000e+00 : f32
    %35 = vector.broadcast %cst : f32 to vector<4x256xf32>
    %c1_i32_9 = arith.constant 1 : i32
    %36 = tpu.dynamic_rotate %31 by %c1_i32_9 dim 1 : vector<4x256xf32>, i32 -> vector<4x256xf32>
    %c255_i32 = arith.constant 255 : i32
    %37 = tpu.dynamic_rotate %31 by %c255_i32 dim 1 : vector<4x256xf32>, i32 -> vector<4x256xf32>
    %38 = vector.shape_cast %22 : vector<1x256xi1> to vector<1x256xi1>
    %39 = vector.broadcast %38 : vector<1x256xi1> to vector<4x256xi1>
    %40 = arith.select %39, %37, %36 : vector<4x256xi1>, vector<4x256xf32>
    %41 = vector.shape_cast %24 : vector<1x256xi1> to vector<1x256xi1>
    %42 = vector.broadcast %41 : vector<1x256xi1> to vector<4x256xi1>
    %43 = arith.select %42, %36, %37 : vector<4x256xi1>, vector<4x256xf32>
    %c0_10 = arith.constant 0 : index
    %c0_11 = arith.constant 0 : index
    %c0_12 = arith.constant 0 : index
    %44 = vector.load %arg2[%c0_10, %c0_11, %c0_12] : memref<9x4x4xbf16, #tpu.memory_space<vmem>>, vector<1x4x4xbf16>
    %45 = vector.shape_cast %44 : vector<1x4x4xbf16> to vector<4x4xbf16>
    %46 = arith.truncf %40 : vector<4x256xf32> to vector<4x256xbf16>
    %cst_13 = arith.constant dense<0.000000e+00> : vector<4x256xf32>
    %47 = tpu.matmul %45, %46, %cst_13 {dimension_numbers = #tpu.dot_dimension_numbers<[1], [0], [0], [1], [0, 0, 1, 1], [], []>} : vector<4x4xbf16>, vector<4x256xbf16>, vector<4x256xf32> -> vector<4x256xf32>
    %48 = arith.addf %35, %47 : vector<4x256xf32>
    %c1 = arith.constant 1 : index
    %c0_14 = arith.constant 0 : index
    %c0_15 = arith.constant 0 : index
    %49 = vector.load %arg2[%c1, %c0_14, %c0_15] : memref<9x4x4xbf16, #tpu.memory_space<vmem>>, vector<1x4x4xbf16>
    %50 = vector.shape_cast %49 : vector<1x4x4xbf16> to vector<4x4xbf16>
    %51 = arith.truncf %31 : vector<4x256xf32> to vector<4x256xbf16>
    %cst_16 = arith.constant dense<0.000000e+00> : vector<4x256xf32>
    %52 = tpu.matmul %50, %51, %cst_16 {dimension_numbers = #tpu.dot_dimension_numbers<[1], [0], [0], [1], [0, 0, 1, 1], [], []>} : vector<4x4xbf16>, vector<4x256xbf16>, vector<4x256xf32> -> vector<4x256xf32>
    %53 = arith.addf %48, %52 : vector<4x256xf32>
    %c2 = arith.constant 2 : index
    %c0_17 = arith.constant 0 : index
    %c0_18 = arith.constant 0 : index
    %54 = vector.load %arg2[%c2, %c0_17, %c0_18] : memref<9x4x4xbf16, #tpu.memory_space<vmem>>, vector<1x4x4xbf16>
    %55 = vector.shape_cast %54 : vector<1x4x4xbf16> to vector<4x4xbf16>
    %56 = arith.truncf %43 : vector<4x256xf32> to vector<4x256xbf16>
    %cst_19 = arith.constant dense<0.000000e+00> : vector<4x256xf32>
    %57 = tpu.matmul %55, %56, %cst_19 {dimension_numbers = #tpu.dot_dimension_numbers<[1], [0], [0], [1], [0, 0, 1, 1], [], []>} : vector<4x4xbf16>, vector<4x256xbf16>, vector<4x256xf32> -> vector<4x256xf32>
    %58 = arith.addf %53, %57 : vector<4x256xf32>
    %c1_i32_20 = arith.constant 1 : i32
    %59 = tpu.dynamic_rotate %26 by %c1_i32_20 dim 1 : vector<4x256xf32>, i32 -> vector<4x256xf32>
    %c255_i32_21 = arith.constant 255 : i32
    %60 = tpu.dynamic_rotate %26 by %c255_i32_21 dim 1 : vector<4x256xf32>, i32 -> vector<4x256xf32>
    %61 = vector.shape_cast %22 : vector<1x256xi1> to vector<1x256xi1>
    %62 = vector.broadcast %61 : vector<1x256xi1> to vector<4x256xi1>
    %63 = arith.select %62, %60, %59 : vector<4x256xi1>, vector<4x256xf32>
    %64 = vector.shape_cast %24 : vector<1x256xi1> to vector<1x256xi1>
    %65 = vector.broadcast %64 : vector<1x256xi1> to vector<4x256xi1>
    %66 = arith.select %65, %59, %60 : vector<4x256xi1>, vector<4x256xf32>
    %c3 = arith.constant 3 : index
    %c0_22 = arith.constant 0 : index
    %c0_23 = arith.constant 0 : index
    %67 = vector.load %arg2[%c3, %c0_22, %c0_23] : memref<9x4x4xbf16, #tpu.memory_space<vmem>>, vector<1x4x4xbf16>
    %68 = vector.shape_cast %67 : vector<1x4x4xbf16> to vector<4x4xbf16>
    %69 = arith.truncf %63 : vector<4x256xf32> to vector<4x256xbf16>
    %cst_24 = arith.constant dense<0.000000e+00> : vector<4x256xf32>
    %70 = tpu.matmul %68, %69, %cst_24 {dimension_numbers = #tpu.dot_dimension_numbers<[1], [0], [0], [1], [0, 0, 1, 1], [], []>} : vector<4x4xbf16>, vector<4x256xbf16>, vector<4x256xf32> -> vector<4x256xf32>
    %71 = arith.addf %58, %70 : vector<4x256xf32>
    %c4 = arith.constant 4 : index
    %c0_25 = arith.constant 0 : index
    %c0_26 = arith.constant 0 : index
    %72 = vector.load %arg2[%c4, %c0_25, %c0_26] : memref<9x4x4xbf16, #tpu.memory_space<vmem>>, vector<1x4x4xbf16>
    %73 = vector.shape_cast %72 : vector<1x4x4xbf16> to vector<4x4xbf16>
    %74 = arith.truncf %26 : vector<4x256xf32> to vector<4x256xbf16>
    %cst_27 = arith.constant dense<0.000000e+00> : vector<4x256xf32>
    %75 = tpu.matmul %73, %74, %cst_27 {dimension_numbers = #tpu.dot_dimension_numbers<[1], [0], [0], [1], [0, 0, 1, 1], [], []>} : vector<4x4xbf16>, vector<4x256xbf16>, vector<4x256xf32> -> vector<4x256xf32>
    %76 = arith.addf %71, %75 : vector<4x256xf32>
    %c5 = arith.constant 5 : index
    %c0_28 = arith.constant 0 : index
    %c0_29 = arith.constant 0 : index
    %77 = vector.load %arg2[%c5, %c0_28, %c0_29] : memref<9x4x4xbf16, #tpu.memory_space<vmem>>, vector<1x4x4xbf16>
    %78 = vector.shape_cast %77 : vector<1x4x4xbf16> to vector<4x4xbf16>
    %79 = arith.truncf %66 : vector<4x256xf32> to vector<4x256xbf16>
    %cst_30 = arith.constant dense<0.000000e+00> : vector<4x256xf32>
    %80 = tpu.matmul %78, %79, %cst_30 {dimension_numbers = #tpu.dot_dimension_numbers<[1], [0], [0], [1], [0, 0, 1, 1], [], []>} : vector<4x4xbf16>, vector<4x256xbf16>, vector<4x256xf32> -> vector<4x256xf32>
    %81 = arith.addf %76, %80 : vector<4x256xf32>
    %c1_i32_31 = arith.constant 1 : i32
    %82 = tpu.dynamic_rotate %34 by %c1_i32_31 dim 1 : vector<4x256xf32>, i32 -> vector<4x256xf32>
    %c255_i32_32 = arith.constant 255 : i32
    %83 = tpu.dynamic_rotate %34 by %c255_i32_32 dim 1 : vector<4x256xf32>, i32 -> vector<4x256xf32>
    %84 = vector.shape_cast %22 : vector<1x256xi1> to vector<1x256xi1>
    %85 = vector.broadcast %84 : vector<1x256xi1> to vector<4x256xi1>
    %86 = arith.select %85, %83, %82 : vector<4x256xi1>, vector<4x256xf32>
    %87 = vector.shape_cast %24 : vector<1x256xi1> to vector<1x256xi1>
    %88 = vector.broadcast %87 : vector<1x256xi1> to vector<4x256xi1>
    %89 = arith.select %88, %82, %83 : vector<4x256xi1>, vector<4x256xf32>
    %c6 = arith.constant 6 : index
    %c0_33 = arith.constant 0 : index
    %c0_34 = arith.constant 0 : index
    %90 = vector.load %arg2[%c6, %c0_33, %c0_34] : memref<9x4x4xbf16, #tpu.memory_space<vmem>>, vector<1x4x4xbf16>
    %91 = vector.shape_cast %90 : vector<1x4x4xbf16> to vector<4x4xbf16>
    %92 = arith.truncf %86 : vector<4x256xf32> to vector<4x256xbf16>
    %cst_35 = arith.constant dense<0.000000e+00> : vector<4x256xf32>
    %93 = tpu.matmul %91, %92, %cst_35 {dimension_numbers = #tpu.dot_dimension_numbers<[1], [0], [0], [1], [0, 0, 1, 1], [], []>} : vector<4x4xbf16>, vector<4x256xbf16>, vector<4x256xf32> -> vector<4x256xf32>
    %94 = arith.addf %81, %93 : vector<4x256xf32>
    %c7 = arith.constant 7 : index
    %c0_36 = arith.constant 0 : index
    %c0_37 = arith.constant 0 : index
    %95 = vector.load %arg2[%c7, %c0_36, %c0_37] : memref<9x4x4xbf16, #tpu.memory_space<vmem>>, vector<1x4x4xbf16>
    %96 = vector.shape_cast %95 : vector<1x4x4xbf16> to vector<4x4xbf16>
    %97 = arith.truncf %34 : vector<4x256xf32> to vector<4x256xbf16>
    %cst_38 = arith.constant dense<0.000000e+00> : vector<4x256xf32>
    %98 = tpu.matmul %96, %97, %cst_38 {dimension_numbers = #tpu.dot_dimension_numbers<[1], [0], [0], [1], [0, 0, 1, 1], [], []>} : vector<4x4xbf16>, vector<4x256xbf16>, vector<4x256xf32> -> vector<4x256xf32>
    %99 = arith.addf %94, %98 : vector<4x256xf32>
    %c8 = arith.constant 8 : index
    %c0_39 = arith.constant 0 : index
    %c0_40 = arith.constant 0 : index
    %100 = vector.load %arg2[%c8, %c0_39, %c0_40] : memref<9x4x4xbf16, #tpu.memory_space<vmem>>, vector<1x4x4xbf16>
    %101 = vector.shape_cast %100 : vector<1x4x4xbf16> to vector<4x4xbf16>
    %102 = arith.truncf %89 : vector<4x256xf32> to vector<4x256xbf16>
    %cst_41 = arith.constant dense<0.000000e+00> : vector<4x256xf32>
    %103 = tpu.matmul %101, %102, %cst_41 {dimension_numbers = #tpu.dot_dimension_numbers<[1], [0], [0], [1], [0, 0, 1, 1], [], []>} : vector<4x4xbf16>, vector<4x256xbf16>, vector<4x256xf32> -> vector<4x256xf32>
    %104 = arith.addf %99, %103 : vector<4x256xf32>
    %cst_42 = arith.constant dense<0.000000e+00> : vector<4xf32>
    %105 = vector.multi_reduction <add>, %104, %cst_42 [1] : vector<4x256xf32> to vector<4xf32>
    %106 = vector.shape_cast %105 : vector<4xf32> to vector<4x1xf32>
    %cst_43 = arith.constant 3.906250e-03 : f32
    %107 = vector.broadcast %cst_43 : f32 to vector<4x1xf32>
    %108 = arith.mulf %106, %107 : vector<4x1xf32>
    %109 = arith.mulf %104, %104 : vector<4x256xf32>
    %cst_44 = arith.constant dense<0.000000e+00> : vector<4xf32>
    %110 = vector.multi_reduction <add>, %109, %cst_44 [1] : vector<4x256xf32> to vector<4xf32>
    %111 = vector.shape_cast %110 : vector<4xf32> to vector<4x1xf32>
    %cst_45 = arith.constant 3.906250e-03 : f32
    %112 = vector.broadcast %cst_45 : f32 to vector<4x1xf32>
    %113 = arith.mulf %111, %112 : vector<4x1xf32>
    %114 = arith.mulf %108, %108 : vector<4x1xf32>
    %115 = arith.subf %113, %114 : vector<4x1xf32>
    %116 = vector.broadcast %108 : vector<4x1xf32> to vector<4x256xf32>
    %117 = arith.subf %104, %116 : vector<4x256xf32>
    %cst_46 = arith.constant 9.99999974E-6 : f32
    %118 = vector.broadcast %cst_46 : f32 to vector<4x1xf32>
    %119 = arith.addf %115, %118 : vector<4x1xf32>
    %120 = math.rsqrt %119 : vector<4x1xf32>
    %121 = vector.broadcast %120 : vector<4x1xf32> to vector<4x256xf32>
    %122 = arith.mulf %117, %121 : vector<4x256xf32>
    %cst_47 = arith.constant 0.000000e+00 : f32
    %123 = vector.broadcast %cst_47 : f32 to vector<4x256xf32>
    %124 = arith.maximumf %122, %123 : vector<4x256xf32>
    %c240_i32_48 = arith.constant 240 : i32
    %125 = tpu.dynamic_rotate %124 by %c240_i32_48 dim 1 : vector<4x256xf32>, i32 -> vector<4x256xf32>
    %c16_i32_49 = arith.constant 16 : i32
    %126 = tpu.dynamic_rotate %124 by %c16_i32_49 dim 1 : vector<4x256xf32>, i32 -> vector<4x256xf32>
    %127 = vector.shape_cast %18 : vector<1x256xi1> to vector<1x256xi1>
    %128 = vector.broadcast %127 : vector<1x256xi1> to vector<4x256xi1>
    %129 = arith.select %128, %125, %126 : vector<4x256xi1>, vector<4x256xf32>
    %130 = vector.shape_cast %20 : vector<1x256xi1> to vector<1x256xi1>
    %131 = vector.broadcast %130 : vector<1x256xi1> to vector<4x256xi1>
    %132 = arith.select %131, %126, %125 : vector<4x256xi1>, vector<4x256xf32>
    %cst_50 = arith.constant 0.000000e+00 : f32
    %133 = vector.broadcast %cst_50 : f32 to vector<4x256xf32>
    %c1_i32_51 = arith.constant 1 : i32
    %134 = tpu.dynamic_rotate %129 by %c1_i32_51 dim 1 : vector<4x256xf32>, i32 -> vector<4x256xf32>
    %c255_i32_52 = arith.constant 255 : i32
    %135 = tpu.dynamic_rotate %129 by %c255_i32_52 dim 1 : vector<4x256xf32>, i32 -> vector<4x256xf32>
    %136 = vector.shape_cast %22 : vector<1x256xi1> to vector<1x256xi1>
    %137 = vector.broadcast %136 : vector<1x256xi1> to vector<4x256xi1>
    %138 = arith.select %137, %135, %134 : vector<4x256xi1>, vector<4x256xf32>
    %139 = vector.shape_cast %24 : vector<1x256xi1> to vector<1x256xi1>
    %140 = vector.broadcast %139 : vector<1x256xi1> to vector<4x256xi1>
    %141 = arith.select %140, %134, %135 : vector<4x256xi1>, vector<4x256xf32>
    %c0_53 = arith.constant 0 : index
    %c0_54 = arith.constant 0 : index
    %c0_55 = arith.constant 0 : index
    %142 = vector.load %arg3[%c0_53, %c0_54, %c0_55] : memref<9x4x4xbf16, #tpu.memory_space<vmem>>, vector<1x4x4xbf16>
    %143 = vector.shape_cast %142 : vector<1x4x4xbf16> to vector<4x4xbf16>
    %144 = arith.truncf %138 : vector<4x256xf32> to vector<4x256xbf16>
    %cst_56 = arith.constant dense<0.000000e+00> : vector<4x256xf32>
    %145 = tpu.matmul %143, %144, %cst_56 {dimension_numbers = #tpu.dot_dimension_numbers<[1], [0], [0], [1], [0, 0, 1, 1], [], []>} : vector<4x4xbf16>, vector<4x256xbf16>, vector<4x256xf32> -> vector<4x256xf32>
    %146 = arith.addf %133, %145 : vector<4x256xf32>
    %c1_57 = arith.constant 1 : index
    %c0_58 = arith.constant 0 : index
    %c0_59 = arith.constant 0 : index
    %147 = vector.load %arg3[%c1_57, %c0_58, %c0_59] : memref<9x4x4xbf16, #tpu.memory_space<vmem>>, vector<1x4x4xbf16>
    %148 = vector.shape_cast %147 : vector<1x4x4xbf16> to vector<4x4xbf16>
    %149 = arith.truncf %129 : vector<4x256xf32> to vector<4x256xbf16>
    %cst_60 = arith.constant dense<0.000000e+00> : vector<4x256xf32>
    %150 = tpu.matmul %148, %149, %cst_60 {dimension_numbers = #tpu.dot_dimension_numbers<[1], [0], [0], [1], [0, 0, 1, 1], [], []>} : vector<4x4xbf16>, vector<4x256xbf16>, vector<4x256xf32> -> vector<4x256xf32>
    %151 = arith.addf %146, %150 : vector<4x256xf32>
    %c2_61 = arith.constant 2 : index
    %c0_62 = arith.constant 0 : index
    %c0_63 = arith.constant 0 : index
    %152 = vector.load %arg3[%c2_61, %c0_62, %c0_63] : memref<9x4x4xbf16, #tpu.memory_space<vmem>>, vector<1x4x4xbf16>
    %153 = vector.shape_cast %152 : vector<1x4x4xbf16> to vector<4x4xbf16>
    %154 = arith.truncf %141 : vector<4x256xf32> to vector<4x256xbf16>
    %cst_64 = arith.constant dense<0.000000e+00> : vector<4x256xf32>
    %155 = tpu.matmul %153, %154, %cst_64 {dimension_numbers = #tpu.dot_dimension_numbers<[1], [0], [0], [1], [0, 0, 1, 1], [], []>} : vector<4x4xbf16>, vector<4x256xbf16>, vector<4x256xf32> -> vector<4x256xf32>
    %156 = arith.addf %151, %155 : vector<4x256xf32>
    %c1_i32_65 = arith.constant 1 : i32
    %157 = tpu.dynamic_rotate %124 by %c1_i32_65 dim 1 : vector<4x256xf32>, i32 -> vector<4x256xf32>
    %c255_i32_66 = arith.constant 255 : i32
    %158 = tpu.dynamic_rotate %124 by %c255_i32_66 dim 1 : vector<4x256xf32>, i32 -> vector<4x256xf32>
    %159 = vector.shape_cast %22 : vector<1x256xi1> to vector<1x256xi1>
    %160 = vector.broadcast %159 : vector<1x256xi1> to vector<4x256xi1>
    %161 = arith.select %160, %158, %157 : vector<4x256xi1>, vector<4x256xf32>
    %162 = vector.shape_cast %24 : vector<1x256xi1> to vector<1x256xi1>
    %163 = vector.broadcast %162 : vector<1x256xi1> to vector<4x256xi1>
    %164 = arith.select %163, %157, %158 : vector<4x256xi1>, vector<4x256xf32>
    %c3_67 = arith.constant 3 : index
    %c0_68 = arith.constant 0 : index
    %c0_69 = arith.constant 0 : index
    %165 = vector.load %arg3[%c3_67, %c0_68, %c0_69] : memref<9x4x4xbf16, #tpu.memory_space<vmem>>, vector<1x4x4xbf16>
    %166 = vector.shape_cast %165 : vector<1x4x4xbf16> to vector<4x4xbf16>
    %167 = arith.truncf %161 : vector<4x256xf32> to vector<4x256xbf16>
    %cst_70 = arith.constant dense<0.000000e+00> : vector<4x256xf32>
    %168 = tpu.matmul %166, %167, %cst_70 {dimension_numbers = #tpu.dot_dimension_numbers<[1], [0], [0], [1], [0, 0, 1, 1], [], []>} : vector<4x4xbf16>, vector<4x256xbf16>, vector<4x256xf32> -> vector<4x256xf32>
    %169 = arith.addf %156, %168 : vector<4x256xf32>
    %c4_71 = arith.constant 4 : index
    %c0_72 = arith.constant 0 : index
    %c0_73 = arith.constant 0 : index
    %170 = vector.load %arg3[%c4_71, %c0_72, %c0_73] : memref<9x4x4xbf16, #tpu.memory_space<vmem>>, vector<1x4x4xbf16>
    %171 = vector.shape_cast %170 : vector<1x4x4xbf16> to vector<4x4xbf16>
    %172 = arith.truncf %124 : vector<4x256xf32> to vector<4x256xbf16>
    %cst_74 = arith.constant dense<0.000000e+00> : vector<4x256xf32>
    %173 = tpu.matmul %171, %172, %cst_74 {dimension_numbers = #tpu.dot_dimension_numbers<[1], [0], [0], [1], [0, 0, 1, 1], [], []>} : vector<4x4xbf16>, vector<4x256xbf16>, vector<4x256xf32> -> vector<4x256xf32>
    %174 = arith.addf %169, %173 : vector<4x256xf32>
    %c5_75 = arith.constant 5 : index
    %c0_76 = arith.constant 0 : index
    %c0_77 = arith.constant 0 : index
    %175 = vector.load %arg3[%c5_75, %c0_76, %c0_77] : memref<9x4x4xbf16, #tpu.memory_space<vmem>>, vector<1x4x4xbf16>
    %176 = vector.shape_cast %175 : vector<1x4x4xbf16> to vector<4x4xbf16>
    %177 = arith.truncf %164 : vector<4x256xf32> to vector<4x256xbf16>
    %cst_78 = arith.constant dense<0.000000e+00> : vector<4x256xf32>
    %178 = tpu.matmul %176, %177, %cst_78 {dimension_numbers = #tpu.dot_dimension_numbers<[1], [0], [0], [1], [0, 0, 1, 1], [], []>} : vector<4x4xbf16>, vector<4x256xbf16>, vector<4x256xf32> -> vector<4x256xf32>
    %179 = arith.addf %174, %178 : vector<4x256xf32>
    %c1_i32_79 = arith.constant 1 : i32
    %180 = tpu.dynamic_rotate %132 by %c1_i32_79 dim 1 : vector<4x256xf32>, i32 -> vector<4x256xf32>
    %c255_i32_80 = arith.constant 255 : i32
    %181 = tpu.dynamic_rotate %132 by %c255_i32_80 dim 1 : vector<4x256xf32>, i32 -> vector<4x256xf32>
    %182 = vector.shape_cast %22 : vector<1x256xi1> to vector<1x256xi1>
    %183 = vector.broadcast %182 : vector<1x256xi1> to vector<4x256xi1>
    %184 = arith.select %183, %181, %180 : vector<4x256xi1>, vector<4x256xf32>
    %185 = vector.shape_cast %24 : vector<1x256xi1> to vector<1x256xi1>
    %186 = vector.broadcast %185 : vector<1x256xi1> to vector<4x256xi1>
    %187 = arith.select %186, %180, %181 : vector<4x256xi1>, vector<4x256xf32>
    %c6_81 = arith.constant 6 : index
    %c0_82 = arith.constant 0 : index
    %c0_83 = arith.constant 0 : index
    %188 = vector.load %arg3[%c6_81, %c0_82, %c0_83] : memref<9x4x4xbf16, #tpu.memory_space<vmem>>, vector<1x4x4xbf16>
    %189 = vector.shape_cast %188 : vector<1x4x4xbf16> to vector<4x4xbf16>
    %190 = arith.truncf %184 : vector<4x256xf32> to vector<4x256xbf16>
    %cst_84 = arith.constant dense<0.000000e+00> : vector<4x256xf32>
    %191 = tpu.matmul %189, %190, %cst_84 {dimension_numbers = #tpu.dot_dimension_numbers<[1], [0], [0], [1], [0, 0, 1, 1], [], []>} : vector<4x4xbf16>, vector<4x256xbf16>, vector<4x256xf32> -> vector<4x256xf32>
    %192 = arith.addf %179, %191 : vector<4x256xf32>
    %c7_85 = arith.constant 7 : index
    %c0_86 = arith.constant 0 : index
    %c0_87 = arith.constant 0 : index
    %193 = vector.load %arg3[%c7_85, %c0_86, %c0_87] : memref<9x4x4xbf16, #tpu.memory_space<vmem>>, vector<1x4x4xbf16>
    %194 = vector.shape_cast %193 : vector<1x4x4xbf16> to vector<4x4xbf16>
    %195 = arith.truncf %132 : vector<4x256xf32> to vector<4x256xbf16>
    %cst_88 = arith.constant dense<0.000000e+00> : vector<4x256xf32>
    %196 = tpu.matmul %194, %195, %cst_88 {dimension_numbers = #tpu.dot_dimension_numbers<[1], [0], [0], [1], [0, 0, 1, 1], [], []>} : vector<4x4xbf16>, vector<4x256xbf16>, vector<4x256xf32> -> vector<4x256xf32>
    %197 = arith.addf %192, %196 : vector<4x256xf32>
    %c8_89 = arith.constant 8 : index
    %c0_90 = arith.constant 0 : index
    %c0_91 = arith.constant 0 : index
    %198 = vector.load %arg3[%c8_89, %c0_90, %c0_91] : memref<9x4x4xbf16, #tpu.memory_space<vmem>>, vector<1x4x4xbf16>
    %199 = vector.shape_cast %198 : vector<1x4x4xbf16> to vector<4x4xbf16>
    %200 = arith.truncf %187 : vector<4x256xf32> to vector<4x256xbf16>
    %cst_92 = arith.constant dense<0.000000e+00> : vector<4x256xf32>
    %201 = tpu.matmul %199, %200, %cst_92 {dimension_numbers = #tpu.dot_dimension_numbers<[1], [0], [0], [1], [0, 0, 1, 1], [], []>} : vector<4x4xbf16>, vector<4x256xbf16>, vector<4x256xf32> -> vector<4x256xf32>
    %202 = arith.addf %197, %201 : vector<4x256xf32>
    %cst_93 = arith.constant dense<0.000000e+00> : vector<4xf32>
    %203 = vector.multi_reduction <add>, %202, %cst_93 [1] : vector<4x256xf32> to vector<4xf32>
    %204 = vector.shape_cast %203 : vector<4xf32> to vector<4x1xf32>
    %cst_94 = arith.constant 3.906250e-03 : f32
    %205 = vector.broadcast %cst_94 : f32 to vector<4x1xf32>
    %206 = arith.mulf %204, %205 : vector<4x1xf32>
    %207 = arith.mulf %202, %202 : vector<4x256xf32>
    %cst_95 = arith.constant dense<0.000000e+00> : vector<4xf32>
    %208 = vector.multi_reduction <add>, %207, %cst_95 [1] : vector<4x256xf32> to vector<4xf32>
    %209 = vector.shape_cast %208 : vector<4xf32> to vector<4x1xf32>
    %cst_96 = arith.constant 3.906250e-03 : f32
    %210 = vector.broadcast %cst_96 : f32 to vector<4x1xf32>
    %211 = arith.mulf %209, %210 : vector<4x1xf32>
    %212 = arith.mulf %206, %206 : vector<4x1xf32>
    %213 = arith.subf %211, %212 : vector<4x1xf32>
    %214 = vector.broadcast %206 : vector<4x1xf32> to vector<4x256xf32>
    %215 = arith.subf %202, %214 : vector<4x256xf32>
    %cst_97 = arith.constant 9.99999974E-6 : f32
    %216 = vector.broadcast %cst_97 : f32 to vector<4x1xf32>
    %217 = arith.addf %213, %216 : vector<4x1xf32>
    %218 = math.rsqrt %217 : vector<4x1xf32>
    %219 = vector.broadcast %218 : vector<4x1xf32> to vector<4x256xf32>
    %220 = arith.mulf %215, %219 : vector<4x256xf32>
    %221 = arith.addf %26, %220 : vector<4x256xf32>
    %c0_98 = arith.constant 0 : index
    %c0_99 = arith.constant 0 : index
    %c0_100 = arith.constant 0 : index
    %222 = vector.load %arg4[%c0_98, %c0_99, %c0_100] : memref<1x4x256xf32, #tpu.memory_space<vmem>>, vector<1x4x256xf32>
    %223 = vector.shape_cast %222 : vector<1x4x256xf32> to vector<4x256xf32>
    %224 = vector.shape_cast %221 : vector<4x256xf32> to vector<1x4x256xf32>
    tpu.vector_store %arg4[%c0_98, %c0_99, %c0_100], %224 {strides = array<i32>} : memref<1x4x256xf32, #tpu.memory_space<vmem>>, vector<1x4x256xf32>,
    return
  }
  func.func @transform_0(%arg0: i32) -> (i32, i32, i32) {
    %c0_i32 = arith.constant 0 : i32
    %c0_i32_0 = arith.constant 0 : i32
    %c0_i32_1 = arith.constant 0 : i32
    return %arg0, %c0_i32, %c0_i32_0 : i32, i32, i32
  }
  func.func @transform_1(%arg0: i32) -> (i32, i32, i32) {
    %c0_i32 = arith.constant 0 : i32
    %c0_i32_0 = arith.constant 0 : i32
    %c0_i32_1 = arith.constant 0 : i32
    %c0_i32_2 = arith.constant 0 : i32
    return %c0_i32, %c0_i32_0, %c0_i32_1 : i32, i32, i32
  }
  func.func @transform_2(%arg0: i32) -> (i32, i32, i32) {
    %c0_i32 = arith.constant 0 : i32
    %c0_i32_0 = arith.constant 0 : i32
    %c0_i32_1 = arith.constant 0 : i32
    %c0_i32_2 = arith.constant 0 : i32
    return %c0_i32, %c0_i32_0, %c0_i32_1 : i32, i32, i32
  }
  func.func @transform_3(%arg0: i32) -> (i32, i32, i32) {
    %c0_i32 = arith.constant 0 : i32
    %c0_i32_0 = arith.constant 0 : i32
    %c0_i32_1 = arith.constant 0 : i32
    return %arg0, %c0_i32, %c0_i32_0 : i32, i32, i32
  }
}

</mosaic_0001>

<llo_original>
// kernel: tpu_custom_call.1
$region0: #{tpu_custom_call.1}
  #allocation0 [shape = 'u32[]', space=smem, size = 0x4, offset = 0x4, fixed_abs, tag = 'smem constant byte address 0x4 - core index']
  #allocation1 [shape = 'u32[144,128]{1,0:T(1,128)}', space=vmem, size = 0x12000, scoped, tag = 'internal scratch']
  %s0 = inlined_call_operand.vmem [shape: f32[2,4,256], index: 0, kind: input, shape index: {}]
  %s1 = inlined_call_operand.vmem [shape: bf16[9,4,4], index: 1, kind: input, shape index: {}]
  %s2 = inlined_call_operand.vmem [shape: bf16[9,4,4], index: 2, kind: input, shape index: {}]
  %s3 = inlined_call_operand.hbm [shape: f32[2,4,256], index: 3, kind: output, shape index: {}]
  %s4 = sld [smem:[#allocation0]]
  $region45: #{tpu_custom_call.1} parent=0
    _
  %s6 = ssub.s32 1, %s4
  %s7 = scalar_select 0, %s6, %s4
  $region1: #{tpu_custom_call.1} parent=0
    #allocation2 [shape = 'u8[8192]{0}', space=vmem, size = 0x2000, scoped, tag = 'output window, operand 0']
    #allocation3 [shape = 's32[2]{0}', space=sflag, size = 0x8, scoped, tag = 'scoped memory for tpu_custom_call.1']
    %8 = vsyncpa [#allocation3], 0
    %s9 = scalar_lea.sflag [#allocation3], 1
    %10 = vsyncpa %s9, 0
    loop: start=0, step=1, limit=4
    $region2: #{tpu_custom_call.1} parent=1 // loop_pre_header
      _
    $region3: #{tpu_custom_call.1} parent=1 // loop_header
      %s12 = sphi 0, %s16
      %p13 = scmp.ge.s32.totalorder %s12, 4
      %s22 = sphi 0, %s24
      %s25 = sphi 0, %s22
      %s26 = sphi 0, %s25
      %s42 = sphi 0, %s26
      %s46 = sphi 0, %s46
      %s48 = sphi 0, %s46
      %s49 = sphi 0, %s48
      %s63 = sphi 0, %s49
      %s67 = sphi 0, %s67
      %s69 = sphi 0, %s67
      %s70 = sphi 0, %s69
      %s84 = sphi 0, %s70
      %s90 = sphi 0, %s92
      %s93 = sphi 0, %s90
      %s94 = sphi 0, %s93
      %s110 = sphi 0, %s94
    $region4: #{tpu_custom_call.1} parent=1 // loop_header_branch
      %15 = sbr.rel (%p13) target = $region8
    $region5: #{tpu_custom_call.1} parent=1 // loop_body
      %s17 = ssub.s32 %s12, 1
      %s18 = ssub.s32 %s12, 2
      %s19 = sadd.s32 %s12, 1
      %s20 = ssub.s32 %s12, %s19
      %p21 = scmp.eq.s32.totalorder %s20, 0
      %s23 = sadd.s32 %s22, 1
      %s24 = scalar_select %p21, %s22, %s23
      %p27 = pneg %p21
      %p28 = scmp.eq.s32.totalorder %s12, 1
      %p29 = por %p27, %p28
      %p30 = scmp.ne.s32.totalorder %s22, %s25
      %p31 = scmp.eq.s32.totalorder %s12, 0
      %p32 = por %p30, %p31
      %p33 = scmp.ne.s32.totalorder %s22, %s25
      %p34 = scmp.eq.s32.totalorder %s17, 1
      %p35 = por %p33, %p34
      %p36 = scmp.ne.s32.totalorder %s25, %s26
      %p37 = scmp.eq.s32.totalorder %s17, 0
      %p38 = por %p36, %p37
      %p39 = scmp.ne.s32.totalorder %s25, %s26
      %p40 = scmp.eq.s32.totalorder %s18, 1
      %p41 = por %p39, %p40
      %p43 = scmp.ne.s32.totalorder %s26, %s42
      %p44 = scmp.eq.s32.totalorder %s18, 0
      %p45 = por %p43, %p44
      %s47 = sadd.s32 %s46, 1
      %p50 = scmp.eq.s32.totalorder %s12, 1
      %p51 = scmp.ne.s32.totalorder %s46, %s48
      %p52 = scmp.eq.s32.totalorder %s12, 0
      %p53 = por %p51, %p52
      %p54 = scmp.ne.s32.totalorder %s46, %s48
      %p55 = scmp.eq.s32.totalorder %s17, 1
      %p56 = por %p54, %p55
      %p57 = scmp.ne.s32.totalorder %s48, %s49
      %p58 = scmp.eq.s32.totalorder %s17, 0
      %p59 = por %p57, %p58
      %p60 = scmp.ne.s32.totalorder %s48, %s49
      %p61 = scmp.eq.s32.totalorder %s18, 1
      %p62 = por %p60, %p61
      %p64 = scmp.ne.s32.totalorder %s49, %s63
      %p65 = scmp.eq.s32.totalorder %s18, 0
      %p66 = por %p64, %p65
      %s68 = sadd.s32 %s67, 1
      %p71 = scmp.eq.s32.totalorder %s12, 1
      %p72 = scmp.ne.s32.totalorder %s67, %s69
      %p73 = scmp.eq.s32.totalorder %s12, 0
      %p74 = por %p72, %p73
      %p75 = scmp.ne.s32.totalorder %s67, %s69
      %p76 = scmp.eq.s32.totalorder %s17, 1
      %p77 = por %p75, %p76
      %p78 = scmp.ne.s32.totalorder %s69, %s70
      %p79 = scmp.eq.s32.totalorder %s17, 0
      %p80 = por %p78, %p79
      %p81 = scmp.ne.s32.totalorder %s69, %s70
      %p82 = scmp.eq.s32.totalorder %s18, 1
      %p83 = por %p81, %p82
      %p85 = scmp.ne.s32.totalorder %s70, %s84
      %p86 = scmp.eq.s32.totalorder %s18, 0
      %p87 = por %p85, %p86
      %s88 = ssub.s32 %s12, %s19
      %p89 = scmp.eq.s32.totalorder %s88, 0
      %s91 = sadd.s32 %s90, 1
      %s92 = scalar_select %p89, %s90, %s91
      %p95 = pneg %p89
      %p96 = scmp.eq.s32.totalorder %s12, 1
      %p97 = por %p95, %p96
      %p98 = scmp.ne.s32.totalorder %s90, %s93
      %p99 = scmp.eq.s32.totalorder %s12, 0
      %p100 = por %p98, %p99
      %p101 = scmp.ne.s32.totalorder %s90, %s93
      %p102 = scmp.eq.s32.totalorder %s17, 1
      %p103 = por %p101, %p102
      %p104 = scmp.ne.s32.totalorder %s93, %s94
      %p105 = scmp.eq.s32.totalorder %s17, 0
      %p106 = por %p104, %p105
      %p107 = scmp.ne.s32.totalorder %s93, %s94
      %p108 = scmp.eq.s32.totalorder %s18, 1
      %p109 = por %p107, %p108
      %p111 = scmp.ne.s32.totalorder %s94, %s110
      %p112 = scmp.eq.s32.totalorder %s18, 0
      %p113 = por %p111, %p112
      %p114 = scmp.le.s32.totalorder 1, %s12
      %p115 = scmp.lt.s32.totalorder %s12, 3
      %p116 = pnand %p114, %p115
      %p117 = pneg %p116
      // Predicated region
      $region9: #{tpu_custom_call.1} parent=5 // pred_check
        _
      $region10: #{tpu_custom_call.1} parent=5 // pred_check_branch
        %119 = sbr.rel (%p116) target = $region12
      $region11: #{tpu_custom_call.1} parent=5 // pred_region
        %s120 = ssub.s32 %s12, 1
        // Predicated region
        $region13: #{tpu_custom_call.1} parent=11 // pred_check
          %p121 = pneg %p59
        $region14: #{tpu_custom_call.1} parent=11 // pred_check_branch
          %123 = sbr.rel (%p121) target = $region16
        $region15: #{tpu_custom_call.1} parent=11 // pred_region
          _
        $region16: #{tpu_custom_call.1} parent=11 // pred_fallthru
          _
        // Predicated region
        $region17: #{tpu_custom_call.1} parent=11 // pred_check
          %p124 = pneg %p80
        $region18: #{tpu_custom_call.1} parent=11 // pred_check_branch
          %126 = sbr.rel (%p124) target = $region20
        $region19: #{tpu_custom_call.1} parent=11 // pred_region
          _
        $region20: #{tpu_custom_call.1} parent=11 // pred_fallthru
          _
      $region12: #{tpu_custom_call.1} parent=5 // pred_fallthru
        _
      %p127 = scmp.lt.s32.totalorder %s12, 2
      // Predicated region
      $region21: #{tpu_custom_call.1} parent=5 // pred_check
        %p128 = pneg %p127
      $region22: #{tpu_custom_call.1} parent=5 // pred_check_branch
        %130 = sbr.rel (%p128) target = $region24
      $region23: #{tpu_custom_call.1} parent=5 // pred_region
        // Predicated region
        $region25: #{tpu_custom_call.1} parent=23 // pred_check
          %p131 = pneg %p32
        $region26: #{tpu_custom_call.1} parent=23 // pred_check_branch
          %133 = sbr.rel (%p131) target = $region28
        $region27: #{tpu_custom_call.1} parent=23 // pred_region
          %p134 = scmp.lt.s32.totalorder %s12, 1
          %s135 = scalar_select %p134, %s12, 1
          %s136 = smul.addr %s135, 2
          %s137 = smul.addr %s136, 4
          %s138 = scalar_lea.vmem %s0, %s137
        $region28: #{tpu_custom_call.1} parent=23 // pred_fallthru
          _
      $region24: #{tpu_custom_call.1} parent=5 // pred_fallthru
        _
      %p139 = scmp.le.s32.totalorder 1, %s12
      %p140 = scmp.lt.s32.totalorder %s12, 3
      %p141 = pnand %p139, %p140
      %p142 = pneg %p141
      // Predicated region
      $region29: #{tpu_custom_call.1} parent=5 // pred_check
        _
      $region30: #{tpu_custom_call.1} parent=5 // pred_check_branch
        %144 = sbr.rel (%p141) target = $region32
      $region31: #{tpu_custom_call.1} parent=5 // pred_region
        %s145 = ssub.s32 %s12, 1
        %p146 = scmp.lt.s32.totalorder %s17, 1
        %s147 = scalar_select %p146, %s17, 1
        %s148 = smul.addr %s147, 2
        %s149 = smul.addr %s148, 4
        %s150 = scalar_lea.vmem %s0, %s149
        %p151 = pneg %p38
        %p152 = pneg %p35
        %p153 = pneg %p59
        %p154 = pneg %p56
        %p155 = pneg %p80
        %p156 = pneg %p77
        %p157 = pneg %p106
        %p158 = pneg %p103
        %s159 = sand.u32 %s93, 1
        %s160 = scalar_lea.sflag [#allocation3], %s159
        %s161 = sand.u32 %s93, 1
        %s162 = smul.addr %s161, 8
        %s163 = scalar_lea.vmem [#allocation2], %s162
        %p164 = scmp.lt.s32.totalorder %s17, 1
        %s165 = scalar_select %p164, %s17, 1
        %s166 = smul.addr %s165, 2
        %s167 = smul.addr %s166, 4
        %s168 = scalar_lea.vmem %s0, %s167
        %v170 = vlaneseq
        %v171 = vand.u32 %v170, 127
        %v172 = vadd.s32 %v171, 128
        %vm173 = vcmp.lt.s32.totalorder %v171, 0
        %v174 = vsub.s32 0, %v171
        %v175 = vsel %vm173, %v174, %v171
        %v176 = vshrl.u32 %v175, 4
        %v177 = vand.u32 %v175, 15
        %v178 = vsub.s32 0, %v177
        %v179 = vsel %vm173, %v178, %v177
        %vm180 = vcmp.lt.s32.totalorder %v172, 0
        %v181 = vsub.s32 0, %v172
        %v182 = vsel %vm180, %v181, %v172
        %v183 = vshrl.u32 %v182, 4
        %v184 = vand.u32 %v182, 15
        %v185 = vsub.s32 0, %v184
        %v186 = vsel %vm180, %v185, %v184
        %vm187 = vcmp.ne.s32.totalorder %v179, 0
        %vm188 = vcmp.ne.s32.totalorder %v186, 0
        %vm189 = vcmp.lt.s32.totalorder %v179, 0
        %vm190 = vcmp.lt.s32.totalorder %v186, 0
        %vm191 = vmand %vm189, %vm187
        %vm192 = vmand %vm190, %vm188
        %v193 = vadd.s32 %v179, 16
        %v194 = vadd.s32 %v186, 16
        %v195 = vsel %vm191, %v193, %v179
        %v196 = vsel %vm192, %v194, %v186
        %vm197 = vcmp.lt.s32.totalorder %v171, 16
        %vm198 = vcmp.lt.s32.totalorder %v172, 16
        %vm199 = vcmp.ge.s32.totalorder %v171, 240
        %vm200 = vcmp.ge.s32.totalorder %v172, 240
        %vm201 = vcmp.eq.s32.totalorder %v195, 0
        %vm202 = vcmp.eq.s32.totalorder %v196, 0
        %vm203 = vcmp.eq.s32.totalorder %v195, 15
        %vm204 = vcmp.eq.s32.totalorder %v196, 15
        %v205 = vld [vmem:[%s168] sm:$0xff]
        %v207 = vcombine.high %v205, %v205
        %209 = vrot.lane.b32.xlu0 %v205, 112
        %v210 = vpop.permute.xlu0 %209
        %211 = vrot.lane.b32.xlu0 %v207, 112
        %v212 = vpop.permute.xlu0 %211
        %vm213 = vcmp.lt.s32.totalorder %v171, 112
        %v214 = vsel %vm213, %v210, %v212
        %v215 = vsel %vm213, %v212, %v210
        %216 = vrot.lane.b32.xlu0 %v205, 16
        %v217 = vpop.permute.xlu0 %216
        %218 = vrot.lane.b32.xlu0 %v207, 16
        %v219 = vpop.permute.xlu0 %218
        %v220 = vsel %vm197, %v217, %v219
        %v221 = vsel %vm197, %v219, %v217
        %v222 = vsel %vm197, 1, 0
        %v223 = vsel %vm198, 1, 0
        %vm224 = vcmp.eq.s32.totalorder %v222, 1
        %vm225 = vcmp.eq.s32.totalorder %v223, 1
        %v226 = vsel %vm224, %v214, %v221
        %v227 = vsel %vm225, %v215, %v220
        %v228 = vsel %vm199, 1, 0
        %v229 = vsel %vm200, 1, 0
        %vm230 = vcmp.eq.s32.totalorder %v228, 1
        %vm231 = vcmp.eq.s32.totalorder %v229, 1
        %v232 = vsel %vm230, %v221, %v214
        %v233 = vsel %vm231, %v220, %v215
        %234 = vrot.lane.b32.xlu0 %v226, 1
        %v235 = vpop.permute.xlu0 %234
        %236 = vrot.lane.b32.xlu0 %v227, 1
        %v237 = vpop.permute.xlu0 %236
        %vm238 = vcmp.lt.s32.totalorder %v171, 1
        %v239 = vsel %vm238, %v235, %v237
        %v240 = vsel %vm238, %v237, %v235
        %241 = vrot.lane.b32.xlu0 %v226, 127
        %v242 = vpop.permute.xlu0 %241
        %243 = vrot.lane.b32.xlu0 %v227, 127
        %v244 = vpop.permute.xlu0 %243
        %vm245 = vcmp.lt.s32.totalorder %v171, 127
        %v246 = vsel %vm245, %v242, %v244
        %v247 = vsel %vm245, %v244, %v242
        %v248 = vsel %vm201, 1, 0
        %v249 = vsel %vm202, 1, 0
        %vm250 = vcmp.eq.s32.totalorder %v248, 1
        %vm251 = vcmp.eq.s32.totalorder %v249, 1
        %v252 = vsel %vm250, %v246, %v240
        %v253 = vsel %vm251, %v247, %v239
        %v254 = vsel %vm203, 1, 0
        %v255 = vsel %vm204, 1, 0
        %vm256 = vcmp.eq.s32.totalorder %v254, 1
        %vm257 = vcmp.eq.s32.totalorder %v255, 1
        %v258 = vsel %vm256, %v240, %v246
        %v259 = vsel %vm257, %v239, %v247
        %v260 = vld [vmem:[%s1] sm:$0x3]
        %v261 = vpack.c.bf16 %v252, %v252
        %v262 = vpack.c.bf16 %v253, %v253
        %s263 = scalar_lea.vmem %s1, 2
        %v264 = vld [vmem:[%s263] sm:$0x3]
        %v265 = vpack.c.bf16 %v226, %v226
        %v266 = vpack.c.bf16 %v227, %v227
        %vm267 = vcmask 31744
        %v269 = vsel %vm267, %v264, 0
        %vm271 = vcmask 1041408
        %v273 = vsel %vm271, %v265, 0
        %v276 = vsel %vm271, %v266, 0
        %278 = vmatprep.subr.bf16.mxu0 %v276
        %279 = vmatpush1.bf16.msra.mxu0 %v273
        %280 = vmatprep.subr.bf16.mxu0 0
        %281 = vmatpush1.bf16.msra.mxu0 0
        %282 = vmatprep.subr.bf16.mxu0 0
        %283 = vmatpush1.bf16.msra.mxu0 0
        %284 = vmatprep.subr.bf16.mxu0 0
        %285 = vmatpush1.bf16.msra.mxu0 0
        %286 = vmatprep.subr.bf16.mxu0 0
        %287 = vmatpush1.bf16.msra.mxu0 0
        %288 = vmatprep.subr.bf16.mxu0 0
        %289 = vmatpush1.bf16.msra.mxu0 0
        %290 = vmatprep.subr.bf16.mxu0 0
        %291 = vmatpush1.bf16.msra.mxu0 0
        %292 = vmatprep.subr.bf16.mxu0 0
        %293 = vmatpush1.bf16.msra.mxu0 0
        %294 = vmatprep.subr.bf16.mxu0 0
        %295 = vmatpush1.bf16.msra.mxu0 0
        %296 = vmatprep.subr.bf16.mxu0 0
        %297 = vmatpush1.bf16.msra.mxu0 0
        %298 = vmatprep.subr.bf16.mxu0 0
        %299 = vmatpush1.bf16.msra.mxu0 0
        %300 = vmatprep.subr.bf16.mxu0 0
        %301 = vmatpush1.bf16.msra.mxu0 0
        %302 = vmatprep.subr.bf16.mxu0 0
        %303 = vmatpush1.bf16.msra.mxu0 0
        %304 = vmatprep.subr.bf16.mxu0 0
        %305 = vmatpush1.bf16.msra.mxu0 0
        %306 = vmatprep.subr.bf16.mxu0 0
        %307 = vmatpush1.bf16.msra.mxu0 0
        %308 = vmatprep.subr.bf16.mxu0 0
        %309 = vmatpush1.bf16.msra.mxu0 0
        %310 = vmatprep.mubr.bf16.mxu0 0
        %311 = vmatmul.mubr.bf16.gmra.mrb[0].mxu0 %v269
        %v312 = vpop.f32.mrb[0].mxu0
        %v313 = vadd.f32 0.0, %v312
        %v314 = vpop.f32.mrb[0].mxu0
        %v315 = vadd.f32 0.0, %v314
        %v316 = vpop.f32.mrb[0].mxu0
        %v317 = vpop.f32.mrb[0].mxu0
        %318 = vdwg.mxu0
        %v320 = vsel %vm267, %v260, 0
        %v323 = vsel %vm271, %v261, 0
        %v326 = vsel %vm271, %v262, 0
        %328 = vmatprep.subr.bf16.mxu0 %v326
        %329 = vmatpush1.bf16.msra.mxu0 %v323
        %330 = vmatprep.subr.bf16.mxu0 0
        %331 = vmatpush1.bf16.msra.mxu0 0
        %332 = vmatprep.subr.bf16.mxu0 0
        %333 = vmatpush1.bf16.msra.mxu0 0
        %334 = vmatprep.subr.bf16.mxu0 0
        %335 = vmatpush1.bf16.msra.mxu0 0
        %336 = vmatprep.subr.bf16.mxu0 0
        %337 = vmatpush1.bf16.msra.mxu0 0
        %338 = vmatprep.subr.bf16.mxu0 0
        %339 = vmatpush1.bf16.msra.mxu0 0
        %340 = vmatprep.subr.bf16.mxu0 0
        %341 = vmatpush1.bf16.msra.mxu0 0
        %342 = vmatprep.subr.bf16.mxu0 0
        %343 = vmatpush1.bf16.msra.mxu0 0
        %344 = vmatprep.subr.bf16.mxu0 0
        %345 = vmatpush1.bf16.msra.mxu0 0
        %346 = vmatprep.subr.bf16.mxu0 0
        %347 = vmatpush1.bf16.msra.mxu0 0
        %348 = vmatprep.subr.bf16.mxu0 0
        %349 = vmatpush1.bf16.msra.mxu0 0
        %350 = vmatprep.subr.bf16.mxu0 0
        %351 = vmatpush1.bf16.msra.mxu0 0
        %352 = vmatprep.subr.bf16.mxu0 0
        %353 = vmatpush1.bf16.msra.mxu0 0
        %354 = vmatprep.subr.bf16.mxu0 0
        %355 = vmatpush1.bf16.msra.mxu0 0
        %356 = vmatprep.subr.bf16.mxu0 0
        %357 = vmatpush1.bf16.msra.mxu0 0
        %358 = vmatprep.subr.bf16.mxu0 0
        %359 = vmatpush1.bf16.msra.mxu0 0
        %360 = vmatprep.mubr.bf16.mxu0 0
        %361 = vmatmul.mubr.bf16.gmra.mrb[0].mxu0 %v320
        %v362 = vpop.f32.mrb[0].mxu0
        %v363 = vadd.f32 %v313, %v362
        %v364 = vpop.f32.mrb[0].mxu0
        %v365 = vadd.f32 %v315, %v364
        %v366 = vpop.f32.mrb[0].mxu0
        %v367 = vpop.f32.mrb[0].mxu0
        %368 = vdwg.mxu0
        %s369 = scalar_lea.vmem %s1, 4
        %v370 = vld [vmem:[%s369] sm:$0x3]
        %v371 = vpack.c.bf16 %v258, %v258
        %v372 = vpack.c.bf16 %v259, %v259
        %v374 = vsel %vm267, %v370, 0
        %v377 = vsel %vm271, %v371, 0
        %v380 = vsel %vm271, %v372, 0
        %382 = vmatprep.subr.bf16.mxu0 %v380
        %383 = vmatpush1.bf16.msra.mxu0 %v377
        %384 = vmatprep.subr.bf16.mxu0 0
        %385 = vmatpush1.bf16.msra.mxu0 0
        %386 = vmatprep.subr.bf16.mxu0 0
        %387 = vmatpush1.bf16.msra.mxu0 0
        %388 = vmatprep.subr.bf16.mxu0 0
        %389 = vmatpush1.bf16.msra.mxu0 0
        %390 = vmatprep.subr.bf16.mxu0 0
        %391 = vmatpush1.bf16.msra.mxu0 0
        %392 = vmatprep.subr.bf16.mxu0 0
        %393 = vmatpush1.bf16.msra.mxu0 0
        %394 = vmatprep.subr.bf16.mxu0 0
        %395 = vmatpush1.bf16.msra.mxu0 0
        %396 = vmatprep.subr.bf16.mxu0 0
        %397 = vmatpush1.bf16.msra.mxu0 0
        %398 = vmatprep.subr.bf16.mxu0 0
        %399 = vmatpush1.bf16.msra.mxu0 0
        %400 = vmatprep.subr.bf16.mxu0 0
        %401 = vmatpush1.bf16.msra.mxu0 0
        %402 = vmatprep.subr.bf16.mxu0 0
        %403 = vmatpush1.bf16.msra.mxu0 0
        %404 = vmatprep.subr.bf16.mxu0 0
        %405 = vmatpush1.bf16.msra.mxu0 0
        %406 = vmatprep.subr.bf16.mxu0 0
        %407 = vmatpush1.bf16.msra.mxu0 0
        %408 = vmatprep.subr.bf16.mxu0 0
        %409 = vmatpush1.bf16.msra.mxu0 0
        %410 = vmatprep.subr.bf16.mxu0 0
        %411 = vmatpush1.bf16.msra.mxu0 0
        %412 = vmatprep.subr.bf16.mxu0 0
        %413 = vmatpush1.bf16.msra.mxu0 0
        %414 = vmatprep.mubr.bf16.mxu0 0
        %415 = vmatmul.mubr.bf16.gmra.mrb[0].mxu0 %v374
        %v416 = vpop.f32.mrb[0].mxu0
        %v417 = vadd.f32 0.0, %v416
        %v418 = vpop.f32.mrb[0].mxu0
        %v419 = vadd.f32 0.0, %v418
        %v420 = vpop.f32.mrb[0].mxu0
        %v421 = vpop.f32.mrb[0].mxu0
        %422 = vdwg.mxu0
        %v423 = vadd.f32 %v363, %v417
        %v424 = vadd.f32 %v365, %v419
        %425 = vrot.lane.b32.xlu0 %v205, 1
        %v426 = vpop.permute.xlu0 %425
        %427 = vrot.lane.b32.xlu0 %v207, 1
        %v428 = vpop.permute.xlu0 %427
        %v429 = vsel %vm238, %v426, %v428
        %v430 = vsel %vm238, %v428, %v426
        %431 = vrot.lane.b32.xlu0 %v205, 127
        %v432 = vpop.permute.xlu0 %431
        %433 = vrot.lane.b32.xlu0 %v207, 127
        %v434 = vpop.permute.xlu0 %433
        %v435 = vsel %vm245, %v432, %v434
        %v436 = vsel %vm245, %v434, %v432
        %v437 = vsel %vm250, %v435, %v430
        %v438 = vsel %vm251, %v436, %v429
        %v439 = vsel %vm256, %v430, %v435
        %v440 = vsel %vm257, %v429, %v436
        %s441 = scalar_lea.vmem %s1, 6
        %v442 = vld [vmem:[%s441] sm:$0x3]
        %v443 = vpack.c.bf16 %v437, %v437
        %v444 = vpack.c.bf16 %v438, %v438
        %v446 = vsel %vm267, %v442, 0
        %v449 = vsel %vm271, %v443, 0
        %v452 = vsel %vm271, %v444, 0
        %454 = vmatprep.subr.bf16.mxu0 %v452
        %455 = vmatpush1.bf16.msra.mxu0 %v449
        %456 = vmatprep.subr.bf16.mxu0 0
        %457 = vmatpush1.bf16.msra.mxu0 0
        %458 = vmatprep.subr.bf16.mxu0 0
        %459 = vmatpush1.bf16.msra.mxu0 0
        %460 = vmatprep.subr.bf16.mxu0 0
        %461 = vmatpush1.bf16.msra.mxu0 0
        %462 = vmatprep.subr.bf16.mxu0 0
        %463 = vmatpush1.bf16.msra.mxu0 0
        %464 = vmatprep.subr.bf16.mxu0 0
        %465 = vmatpush1.bf16.msra.mxu0 0
        %466 = vmatprep.subr.bf16.mxu0 0
        %467 = vmatpush1.bf16.msra.mxu0 0
        %468 = vmatprep.subr.bf16.mxu0 0
        %469 = vmatpush1.bf16.msra.mxu0 0
        %470 = vmatprep.subr.bf16.mxu0 0
        %471 = vmatpush1.bf16.msra.mxu0 0
        %472 = vmatprep.subr.bf16.mxu0 0
        %473 = vmatpush1.bf16.msra.mxu0 0
        %474 = vmatprep.subr.bf16.mxu0 0
        %475 = vmatpush1.bf16.msra.mxu0 0
        %476 = vmatprep.subr.bf16.mxu0 0
        %477 = vmatpush1.bf16.msra.mxu0 0
        %478 = vmatprep.subr.bf16.mxu0 0
        %479 = vmatpush1.bf16.msra.mxu0 0
        %480 = vmatprep.subr.bf16.mxu0 0
        %481 = vmatpush1.bf16.msra.mxu0 0
        %482 = vmatprep.subr.bf16.mxu0 0
        %483 = vmatpush1.bf16.msra.mxu0 0
        %484 = vmatprep.subr.bf16.mxu0 0
        %485 = vmatpush1.bf16.msra.mxu0 0
        %486 = vmatprep.mubr.bf16.mxu0 0
        %487 = vmatmul.mubr.bf16.gmra.mrb[0].mxu0 %v446
        %v488 = vpop.f32.mrb[0].mxu0
        %v489 = vadd.f32 0.0, %v488
        %v490 = vpop.f32.mrb[0].mxu0
        %v491 = vadd.f32 0.0, %v490
        %v492 = vpop.f32.mrb[0].mxu0
        %v493 = vpop.f32.mrb[0].mxu0
        %494 = vdwg.mxu0
        %v495 = vadd.f32 %v423, %v489
        %v496 = vadd.f32 %v424, %v491
        %s497 = scalar_lea.vmem %s1, 8
        %v498 = vld [vmem:[%s497] sm:$0x3]
        %v499 = vpack.c.bf16 %v205, %v205
        %v500 = vpack.c.bf16 %v207, %v207
        %v502 = vsel %vm267, %v498, 0
        %v505 = vsel %vm271, %v499, 0
        %v508 = vsel %vm271, %v500, 0
        %510 = vmatprep.subr.bf16.mxu0 %v508
        %511 = vmatpush1.bf16.msra.mxu0 %v505
        %512 = vmatprep.subr.bf16.mxu0 0
        %513 = vmatpush1.bf16.msra.mxu0 0
        %514 = vmatprep.subr.bf16.mxu0 0
        %515 = vmatpush1.bf16.msra.mxu0 0
        %516 = vmatprep.subr.bf16.mxu0 0
        %517 = vmatpush1.bf16.msra.mxu0 0
        %518 = vmatprep.subr.bf16.mxu0 0
        %519 = vmatpush1.bf16.msra.mxu0 0
        %520 = vmatprep.subr.bf16.mxu0 0
        %521 = vmatpush1.bf16.msra.mxu0 0
        %522 = vmatprep.subr.bf16.mxu0 0
        %523 = vmatpush1.bf16.msra.mxu0 0
        %524 = vmatprep.subr.bf16.mxu0 0
        %525 = vmatpush1.bf16.msra.mxu0 0
        %526 = vmatprep.subr.bf16.mxu0 0
        %527 = vmatpush1.bf16.msra.mxu0 0
        %528 = vmatprep.subr.bf16.mxu0 0
        %529 = vmatpush1.bf16.msra.mxu0 0
        %530 = vmatprep.subr.bf16.mxu0 0
        %531 = vmatpush1.bf16.msra.mxu0 0
        %532 = vmatprep.subr.bf16.mxu0 0
        %533 = vmatpush1.bf16.msra.mxu0 0
        %534 = vmatprep.subr.bf16.mxu0 0
        %535 = vmatpush1.bf16.msra.mxu0 0
        %536 = vmatprep.subr.bf16.mxu0 0
        %537 = vmatpush1.bf16.msra.mxu0 0
        %538 = vmatprep.subr.bf16.mxu0 0
        %539 = vmatpush1.bf16.msra.mxu0 0
        %540 = vmatprep.subr.bf16.mxu0 0
        %541 = vmatpush1.bf16.msra.mxu0 0
        %542 = vmatprep.mubr.bf16.mxu0 0
        %543 = vmatmul.mubr.bf16.gmra.mrb[0].mxu0 %v502
        %v544 = vpop.f32.mrb[0].mxu0
        %v545 = vadd.f32 0.0, %v544
        %v546 = vpop.f32.mrb[0].mxu0
        %v547 = vadd.f32 0.0, %v546
        %v548 = vpop.f32.mrb[0].mxu0
        %v549 = vpop.f32.mrb[0].mxu0
        %550 = vdwg.mxu0
        %v551 = vadd.f32 %v495, %v545
        %v552 = vadd.f32 %v496, %v547
        %s553 = scalar_lea.vmem %s1, 10
        %v554 = vld [vmem:[%s553] sm:$0x3]
        %v555 = vpack.c.bf16 %v439, %v439
        %v556 = vpack.c.bf16 %v440, %v440
        %v558 = vsel %vm267, %v554, 0
        %v561 = vsel %vm271, %v555, 0
        %v564 = vsel %vm271, %v556, 0
        %566 = vmatprep.subr.bf16.mxu0 %v564
        %567 = vmatpush1.bf16.msra.mxu0 %v561
        %568 = vmatprep.subr.bf16.mxu0 0
        %569 = vmatpush1.bf16.msra.mxu0 0
        %570 = vmatprep.subr.bf16.mxu0 0
        %571 = vmatpush1.bf16.msra.mxu0 0
        %572 = vmatprep.subr.bf16.mxu0 0
        %573 = vmatpush1.bf16.msra.mxu0 0
        %574 = vmatprep.subr.bf16.mxu0 0
        %575 = vmatpush1.bf16.msra.mxu0 0
        %576 = vmatprep.subr.bf16.mxu0 0
        %577 = vmatpush1.bf16.msra.mxu0 0
        %578 = vmatprep.subr.bf16.mxu0 0
        %579 = vmatpush1.bf16.msra.mxu0 0
        %580 = vmatprep.subr.bf16.mxu0 0
        %581 = vmatpush1.bf16.msra.mxu0 0
        %582 = vmatprep.subr.bf16.mxu0 0
        %583 = vmatpush1.bf16.msra.mxu0 0
        %584 = vmatprep.subr.bf16.mxu0 0
        %585 = vmatpush1.bf16.msra.mxu0 0
        %586 = vmatprep.subr.bf16.mxu0 0
        %587 = vmatpush1.bf16.msra.mxu0 0
        %588 = vmatprep.subr.bf16.mxu0 0
        %589 = vmatpush1.bf16.msra.mxu0 0
        %590 = vmatprep.subr.bf16.mxu0 0
        %591 = vmatpush1.bf16.msra.mxu0 0
        %592 = vmatprep.subr.bf16.mxu0 0
        %593 = vmatpush1.bf16.msra.mxu0 0
        %594 = vmatprep.subr.bf16.mxu0 0
        %595 = vmatpush1.bf16.msra.mxu0 0
        %596 = vmatprep.subr.bf16.mxu0 0
        %597 = vmatpush1.bf16.msra.mxu0 0
        %598 = vmatprep.mubr.bf16.mxu0 0
        %599 = vmatmul.mubr.bf16.gmra.mrb[0].mxu0 %v558
        %v600 = vpop.f32.mrb[0].mxu0
        %v601 = vadd.f32 0.0, %v600
        %v602 = vpop.f32.mrb[0].mxu0
        %v603 = vadd.f32 0.0, %v602
        %v604 = vpop.f32.mrb[0].mxu0
        %v605 = vpop.f32.mrb[0].mxu0
        %606 = vdwg.mxu0
        %v607 = vadd.f32 %v551, %v601
        %v608 = vadd.f32 %v552, %v603
        %609 = vrot.lane.b32.xlu0 %v232, 1
        %v610 = vpop.permute.xlu0 %609
        %611 = vrot.lane.b32.xlu0 %v233, 1
        %v612 = vpop.permute.xlu0 %611
        %v613 = vsel %vm238, %v610, %v612
        %v614 = vsel %vm238, %v612, %v610
        %615 = vrot.lane.b32.xlu0 %v232, 127
        %v616 = vpop.permute.xlu0 %615
        %617 = vrot.lane.b32.xlu0 %v233, 127
        %v618 = vpop.permute.xlu0 %617
        %v619 = vsel %vm245, %v616, %v618
        %v620 = vsel %vm245, %v618, %v616
        %v621 = vsel %vm250, %v619, %v614
        %v622 = vsel %vm251, %v620, %v613
        %v623 = vsel %vm256, %v614, %v619
        %v624 = vsel %vm257, %v613, %v620
        %s625 = scalar_lea.vmem %s1, 12
        %v626 = vld [vmem:[%s625] sm:$0x3]
        %v627 = vpack.c.bf16 %v621, %v621
        %v628 = vpack.c.bf16 %v622, %v622
        %v630 = vsel %vm267, %v626, 0
        %v633 = vsel %vm271, %v627, 0
        %v636 = vsel %vm271, %v628, 0
        %638 = vmatprep.subr.bf16.mxu0 %v636
        %639 = vmatpush1.bf16.msra.mxu0 %v633
        %640 = vmatprep.subr.bf16.mxu0 0
        %641 = vmatpush1.bf16.msra.mxu0 0
        %642 = vmatprep.subr.bf16.mxu0 0
        %643 = vmatpush1.bf16.msra.mxu0 0
        %644 = vmatprep.subr.bf16.mxu0 0
        %645 = vmatpush1.bf16.msra.mxu0 0
        %646 = vmatprep.subr.bf16.mxu0 0
        %647 = vmatpush1.bf16.msra.mxu0 0
        %648 = vmatprep.subr.bf16.mxu0 0
        %649 = vmatpush1.bf16.msra.mxu0 0
        %650 = vmatprep.subr.bf16.mxu0 0
        %651 = vmatpush1.bf16.msra.mxu0 0
        %652 = vmatprep.subr.bf16.mxu0 0
        %653 = vmatpush1.bf16.msra.mxu0 0
        %654 = vmatprep.subr.bf16.mxu0 0
        %655 = vmatpush1.bf16.msra.mxu0 0
        %656 = vmatprep.subr.bf16.mxu0 0
        %657 = vmatpush1.bf16.msra.mxu0 0
        %658 = vmatprep.subr.bf16.mxu0 0
        %659 = vmatpush1.bf16.msra.mxu0 0
        %660 = vmatprep.subr.bf16.mxu0 0
        %661 = vmatpush1.bf16.msra.mxu0 0
        %662 = vmatprep.subr.bf16.mxu0 0
        %663 = vmatpush1.bf16.msra.mxu0 0
        %664 = vmatprep.subr.bf16.mxu0 0
        %665 = vmatpush1.bf16.msra.mxu0 0
        %666 = vmatprep.subr.bf16.mxu0 0
        %667 = vmatpush1.bf16.msra.mxu0 0
        %668 = vmatprep.subr.bf16.mxu0 0
        %669 = vmatpush1.bf16.msra.mxu0 0
        %670 = vmatprep.mubr.bf16.mxu0 0
        %671 = vmatmul.mubr.bf16.gmra.mrb[0].mxu0 %v630
        %v672 = vpop.f32.mrb[0].mxu0
        %v673 = vadd.f32 0.0, %v672
        %v674 = vpop.f32.mrb[0].mxu0
        %v675 = vadd.f32 0.0, %v674
        %v676 = vpop.f32.mrb[0].mxu0
        %v677 = vpop.f32.mrb[0].mxu0
        %678 = vdwg.mxu0
        %v679 = vadd.f32 %v607, %v673
        %v680 = vadd.f32 %v608, %v675
        %s681 = scalar_lea.vmem %s1, 14
        %v682 = vld [vmem:[%s681] sm:$0x3]
        %v683 = vpack.c.bf16 %v232, %v232
        %v684 = vpack.c.bf16 %v233, %v233
        %v686 = vsel %vm267, %v682, 0
        %v689 = vsel %vm271, %v683, 0
        %v692 = vsel %vm271, %v684, 0
        %694 = vmatprep.subr.bf16.mxu0 %v692
        %695 = vmatpush1.bf16.msra.mxu0 %v689
        %696 = vmatprep.subr.bf16.mxu0 0
        %697 = vmatpush1.bf16.msra.mxu0 0
        %698 = vmatprep.subr.bf16.mxu0 0
        %699 = vmatpush1.bf16.msra.mxu0 0
        %700 = vmatprep.subr.bf16.mxu0 0
        %701 = vmatpush1.bf16.msra.mxu0 0
        %702 = vmatprep.subr.bf16.mxu0 0
        %703 = vmatpush1.bf16.msra.mxu0 0
        %704 = vmatprep.subr.bf16.mxu0 0
        %705 = vmatpush1.bf16.msra.mxu0 0
        %706 = vmatprep.subr.bf16.mxu0 0
        %707 = vmatpush1.bf16.msra.mxu0 0
        %708 = vmatprep.subr.bf16.mxu0 0
        %709 = vmatpush1.bf16.msra.mxu0 0
        %710 = vmatprep.subr.bf16.mxu0 0
        %711 = vmatpush1.bf16.msra.mxu0 0
        %712 = vmatprep.subr.bf16.mxu0 0
        %713 = vmatpush1.bf16.msra.mxu0 0
        %714 = vmatprep.subr.bf16.mxu0 0
        %715 = vmatpush1.bf16.msra.mxu0 0
        %716 = vmatprep.subr.bf16.mxu0 0
        %717 = vmatpush1.bf16.msra.mxu0 0
        %718 = vmatprep.subr.bf16.mxu0 0
        %719 = vmatpush1.bf16.msra.mxu0 0
        %720 = vmatprep.subr.bf16.mxu0 0
        %721 = vmatpush1.bf16.msra.mxu0 0
        %722 = vmatprep.subr.bf16.mxu0 0
        %723 = vmatpush1.bf16.msra.mxu0 0
        %724 = vmatprep.subr.bf16.mxu0 0
        %725 = vmatpush1.bf16.msra.mxu0 0
        %726 = vmatprep.mubr.bf16.mxu0 0
        %727 = vmatmul.mubr.bf16.gmra.mrb[0].mxu0 %v686
        %v728 = vpop.f32.mrb[0].mxu0
        %v729 = vadd.f32 0.0, %v728
        %v730 = vpop.f32.mrb[0].mxu0
        %v731 = vadd.f32 0.0, %v730
        %v732 = vpop.f32.mrb[0].mxu0
        %v733 = vpop.f32.mrb[0].mxu0
        %734 = vdwg.mxu0
        %v735 = vadd.f32 %v679, %v729
        %v736 = vadd.f32 %v680, %v731
        %s737 = scalar_lea.vmem %s1, 16
        %v738 = vld [vmem:[%s737] sm:$0x3]
        %v739 = vpack.c.bf16 %v623, %v623
        %v740 = vpack.c.bf16 %v624, %v624
        %v742 = vsel %vm267, %v738, 0
        %v745 = vsel %vm271, %v739, 0
        %v748 = vsel %vm271, %v740, 0
        %750 = vmatprep.subr.bf16.mxu0 %v748
        %751 = vmatpush1.bf16.msra.mxu0 %v745
        %752 = vmatprep.subr.bf16.mxu0 0
        %753 = vmatpush1.bf16.msra.mxu0 0
        %754 = vmatprep.subr.bf16.mxu0 0
        %755 = vmatpush1.bf16.msra.mxu0 0
        %756 = vmatprep.subr.bf16.mxu0 0
        %757 = vmatpush1.bf16.msra.mxu0 0
        %758 = vmatprep.subr.bf16.mxu0 0
        %759 = vmatpush1.bf16.msra.mxu0 0
        %760 = vmatprep.subr.bf16.mxu0 0
        %761 = vmatpush1.bf16.msra.mxu0 0
        %762 = vmatprep.subr.bf16.mxu0 0
        %763 = vmatpush1.bf16.msra.mxu0 0
        %764 = vmatprep.subr.bf16.mxu0 0
        %765 = vmatpush1.bf16.msra.mxu0 0
        %766 = vmatprep.subr.bf16.mxu0 0
        %767 = vmatpush1.bf16.msra.mxu0 0
        %768 = vmatprep.subr.bf16.mxu0 0
        %769 = vmatpush1.bf16.msra.mxu0 0
        %770 = vmatprep.subr.bf16.mxu0 0
        %771 = vmatpush1.bf16.msra.mxu0 0
        %772 = vmatprep.subr.bf16.mxu0 0
        %773 = vmatpush1.bf16.msra.mxu0 0
        %774 = vmatprep.subr.bf16.mxu0 0
        %775 = vmatpush1.bf16.msra.mxu0 0
        %776 = vmatprep.subr.bf16.mxu0 0
        %777 = vmatpush1.bf16.msra.mxu0 0
        %778 = vmatprep.subr.bf16.mxu0 0
        %779 = vmatpush1.bf16.msra.mxu0 0
        %780 = vmatprep.subr.bf16.mxu0 0
        %781 = vmatpush1.bf16.msra.mxu0 0
        %782 = vmatprep.mubr.bf16.mxu0 0
        %783 = vmatmul.mubr.bf16.gmra.mrb[0].mxu0 %v742
        %v784 = vpop.f32.mrb[0].mxu0
        %v785 = vadd.f32 0.0, %v784
        %v786 = vpop.f32.mrb[0].mxu0
        %v787 = vadd.f32 0.0, %v786
        %v788 = vpop.f32.mrb[0].mxu0
        %v789 = vpop.f32.mrb[0].mxu0
        %790 = vdwg.mxu0
        %v791 = vadd.f32 %v735, %v785
        %v792 = vadd.f32 %v736, %v787
        %vm793 = vcmask 1043456
        %v794 = vsel %vm793, %v791, 0.0
        %v795 = vsel %vm793, %v792, 0.0
        %v796 = vadd.f32 %v794, %v795
        %797 = vadd.xlane.f32.xlu0 %v796
        %v798 = vpop.xlane.xlu0 %797
        %v799 = vmul.f32 %v798, 0.00390625
        %v800 = vmul.f32 %v791, %v791
        %v801 = vmul.f32 %v792, %v792
        %v802 = vsel %vm793, %v800, 0.0
        %v803 = vsel %vm793, %v801, 0.0
        %v804 = vadd.f32 %v802, %v803
        %805 = vadd.xlane.f32.xlu0 %v804
        %v806 = vpop.xlane.xlu0 %805
        %v807 = vmul.f32 %v806, 0.00390625
        %v808 = vmul.f32 %v799, %v799
        %v809 = vsub.f32 %v807, %v808
        %v810 = vsub.f32 %v791, %v799
        %v811 = vsub.f32 %v792, %v799
        %v812 = vadd.f32 %v809, 1e-05
        %v813 = vrsqrt.pop %v812
        %v814 = vmul.f32 %v810, %v813
        %v815 = vmul.f32 %v811, %v813
        %v816 = vmax.f32 %v814, 0.0
        %v817 = vmax.f32 %v815, 0.0
        %818 = vrot.lane.b32.xlu0 %v816, 112
        %v819 = vpop.permute.xlu0 %818
        %820 = vrot.lane.b32.xlu0 %v817, 112
        %v821 = vpop.permute.xlu0 %820
        %v822 = vsel %vm213, %v819, %v821
        %v823 = vsel %vm213, %v821, %v819
        %824 = vrot.lane.b32.xlu0 %v816, 16
        %v825 = vpop.permute.xlu0 %824
        %826 = vrot.lane.b32.xlu0 %v817, 16
        %v827 = vpop.permute.xlu0 %826
        %v828 = vsel %vm197, %v825, %v827
        %v829 = vsel %vm197, %v827, %v825
        %v830 = vsel %vm224, %v822, %v829
        %v831 = vsel %vm225, %v823, %v828
        %v832 = vsel %vm230, %v829, %v822
        %v833 = vsel %vm231, %v828, %v823
        %834 = vrot.lane.b32.xlu0 %v830, 1
        %v835 = vpop.permute.xlu0 %834
        %836 = vrot.lane.b32.xlu0 %v831, 1
        %v837 = vpop.permute.xlu0 %836
        %v838 = vsel %vm238, %v835, %v837
        %v839 = vsel %vm238, %v837, %v835
        %840 = vrot.lane.b32.xlu0 %v830, 127
        %v841 = vpop.permute.xlu0 %840
        %842 = vrot.lane.b32.xlu0 %v831, 127
        %v843 = vpop.permute.xlu0 %842
        %v844 = vsel %vm245, %v841, %v843
        %v845 = vsel %vm245, %v843, %v841
        %v846 = vsel %vm250, %v844, %v839
        %v847 = vsel %vm251, %v845, %v838
        %v848 = vsel %vm256, %v839, %v844
        %v849 = vsel %vm257, %v838, %v845
        %v850 = vld [vmem:[%s2] sm:$0x3]
        %v851 = vpack.c.bf16 %v846, %v846
        %v852 = vpack.c.bf16 %v847, %v847
        %s853 = scalar_lea.vmem %s2, 2
        %v854 = vld [vmem:[%s853] sm:$0x3]
        %v855 = vpack.c.bf16 %v830, %v830
        %v856 = vpack.c.bf16 %v831, %v831
        %v858 = vsel %vm267, %v854, 0
        %v861 = vsel %vm271, %v855, 0
        %v864 = vsel %vm271, %v856, 0
        %866 = vmatprep.subr.bf16.mxu0 %v864
        %867 = vmatpush1.bf16.msra.mxu0 %v861
        %868 = vmatprep.subr.bf16.mxu0 0
        %869 = vmatpush1.bf16.msra.mxu0 0
        %870 = vmatprep.subr.bf16.mxu0 0
        %871 = vmatpush1.bf16.msra.mxu0 0
        %872 = vmatprep.subr.bf16.mxu0 0
        %873 = vmatpush1.bf16.msra.mxu0 0
        %874 = vmatprep.subr.bf16.mxu0 0
        %875 = vmatpush1.bf16.msra.mxu0 0
        %876 = vmatprep.subr.bf16.mxu0 0
        %877 = vmatpush1.bf16.msra.mxu0 0
        %878 = vmatprep.subr.bf16.mxu0 0
        %879 = vmatpush1.bf16.msra.mxu0 0
        %880 = vmatprep.subr.bf16.mxu0 0
        %881 = vmatpush1.bf16.msra.mxu0 0
        %882 = vmatprep.subr.bf16.mxu0 0
        %883 = vmatpush1.bf16.msra.mxu0 0
        %884 = vmatprep.subr.bf16.mxu0 0
        %885 = vmatpush1.bf16.msra.mxu0 0
        %886 = vmatprep.subr.bf16.mxu0 0
        %887 = vmatpush1.bf16.msra.mxu0 0
        %888 = vmatprep.subr.bf16.mxu0 0
        %889 = vmatpush1.bf16.msra.mxu0 0
        %890 = vmatprep.subr.bf16.mxu0 0
        %891 = vmatpush1.bf16.msra.mxu0 0
        %892 = vmatprep.subr.bf16.mxu0 0
        %893 = vmatpush1.bf16.msra.mxu0 0
        %894 = vmatprep.subr.bf16.mxu0 0
        %895 = vmatpush1.bf16.msra.mxu0 0
        %896 = vmatprep.subr.bf16.mxu0 0
        %897 = vmatpush1.bf16.msra.mxu0 0
        %898 = vmatprep.mubr.bf16.mxu0 0
        %899 = vmatmul.mubr.bf16.gmra.mrb[0].mxu0 %v858
        %v900 = vpop.f32.mrb[0].mxu0
        %v901 = vadd.f32 0.0, %v900
        %v902 = vpop.f32.mrb[0].mxu0
        %v903 = vadd.f32 0.0, %v902
        %v904 = vpop.f32.mrb[0].mxu0
        %v905 = vpop.f32.mrb[0].mxu0
        %906 = vdwg.mxu0
        %v908 = vsel %vm267, %v850, 0
        %v911 = vsel %vm271, %v851, 0
        %v914 = vsel %vm271, %v852, 0
        %916 = vmatprep.subr.bf16.mxu0 %v914
        %917 = vmatpush1.bf16.msra.mxu0 %v911
        %918 = vmatprep.subr.bf16.mxu0 0
        %919 = vmatpush1.bf16.msra.mxu0 0
        %920 = vmatprep.subr.bf16.mxu0 0
        %921 = vmatpush1.bf16.msra.mxu0 0
        %922 = vmatprep.subr.bf16.mxu0 0
        %923 = vmatpush1.bf16.msra.mxu0 0
        %924 = vmatprep.subr.bf16.mxu0 0
        %925 = vmatpush1.bf16.msra.mxu0 0
        %926 = vmatprep.subr.bf16.mxu0 0
        %927 = vmatpush1.bf16.msra.mxu0 0
        %928 = vmatprep.subr.bf16.mxu0 0
        %929 = vmatpush1.bf16.msra.mxu0 0
        %930 = vmatprep.subr.bf16.mxu0 0
        %931 = vmatpush1.bf16.msra.mxu0 0
        %932 = vmatprep.subr.bf16.mxu0 0
        %933 = vmatpush1.bf16.msra.mxu0 0
        %934 = vmatprep.subr.bf16.mxu0 0
        %935 = vmatpush1.bf16.msra.mxu0 0
        %936 = vmatprep.subr.bf16.mxu0 0
        %937 = vmatpush1.bf16.msra.mxu0 0
        %938 = vmatprep.subr.bf16.mxu0 0
        %939 = vmatpush1.bf16.msra.mxu0 0
        %940 = vmatprep.subr.bf16.mxu0 0
        %941 = vmatpush1.bf16.msra.mxu0 0
        %942 = vmatprep.subr.bf16.mxu0 0
        %943 = vmatpush1.bf16.msra.mxu0 0
        %944 = vmatprep.subr.bf16.mxu0 0
        %945 = vmatpush1.bf16.msra.mxu0 0
        %946 = vmatprep.subr.bf16.mxu0 0
        %947 = vmatpush1.bf16.msra.mxu0 0
        %948 = vmatprep.mubr.bf16.mxu0 0
        %949 = vmatmul.mubr.bf16.gmra.mrb[0].mxu0 %v908
        %v950 = vpop.f32.mrb[0].mxu0
        %v951 = vadd.f32 %v901, %v950
        %v952 = vpop.f32.mrb[0].mxu0
        %v953 = vadd.f32 %v903, %v952
        %v954 = vpop.f32.mrb[0].mxu0
        %v955 = vpop.f32.mrb[0].mxu0
        %956 = vdwg.mxu0
        %s957 = scalar_lea.vmem %s2, 4
        %v958 = vld [vmem:[%s957] sm:$0x3]
        %v959 = vpack.c.bf16 %v848, %v848
        %v960 = vpack.c.bf16 %v849, %v849
        %v962 = vsel %vm267, %v958, 0
        %v965 = vsel %vm271, %v959, 0
        %v968 = vsel %vm271, %v960, 0
        %970 = vmatprep.subr.bf16.mxu0 %v968
        %971 = vmatpush1.bf16.msra.mxu0 %v965
        %972 = vmatprep.subr.bf16.mxu0 0
        %973 = vmatpush1.bf16.msra.mxu0 0
        %974 = vmatprep.subr.bf16.mxu0 0
        %975 = vmatpush1.bf16.msra.mxu0 0
        %976 = vmatprep.subr.bf16.mxu0 0
        %977 = vmatpush1.bf16.msra.mxu0 0
        %978 = vmatprep.subr.bf16.mxu0 0
        %979 = vmatpush1.bf16.msra.mxu0 0
        %980 = vmatprep.subr.bf16.mxu0 0
        %981 = vmatpush1.bf16.msra.mxu0 0
        %982 = vmatprep.subr.bf16.mxu0 0
        %983 = vmatpush1.bf16.msra.mxu0 0
        %984 = vmatprep.subr.bf16.mxu0 0
        %985 = vmatpush1.bf16.msra.mxu0 0
        %986 = vmatprep.subr.bf16.mxu0 0
        %987 = vmatpush1.bf16.msra.mxu0 0
        %988 = vmatprep.subr.bf16.mxu0 0
        %989 = vmatpush1.bf16.msra.mxu0 0
        %990 = vmatprep.subr.bf16.mxu0 0
        %991 = vmatpush1.bf16.msra.mxu0 0
        %992 = vmatprep.subr.bf16.mxu0 0
        %993 = vmatpush1.bf16.msra.mxu0 0
        %994 = vmatprep.subr.bf16.mxu0 0
        %995 = vmatpush1.bf16.msra.mxu0 0
        %996 = vmatprep.subr.bf16.mxu0 0
        %997 = vmatpush1.bf16.msra.mxu0 0
        %998 = vmatprep.subr.bf16.mxu0 0
        %999 = vmatpush1.bf16.msra.mxu0 0
        %1000 = vmatprep.subr.bf16.mxu0 0
        %1001 = vmatpush1.bf16.msra.mxu0 0
        %1002 = vmatprep.mubr.bf16.mxu0 0
        %1003 = vmatmul.mubr.bf16.gmra.mrb[0].mxu0 %v962
        %v1004 = vpop.f32.mrb[0].mxu0
        %v1005 = vadd.f32 0.0, %v1004
        %v1006 = vpop.f32.mrb[0].mxu0
        %v1007 = vadd.f32 0.0, %v1006
        %v1008 = vpop.f32.mrb[0].mxu0
        %v1009 = vpop.f32.mrb[0].mxu0
        %1010 = vdwg.mxu0
        %v1011 = vadd.f32 %v951, %v1005
        %v1012 = vadd.f32 %v953, %v1007
        %1013 = vrot.lane.b32.xlu0 %v816, 1
        %v1014 = vpop.permute.xlu0 %1013
        %1015 = vrot.lane.b32.xlu0 %v817, 1
        %v1016 = vpop.permute.xlu0 %1015
        %v1017 = vsel %vm238, %v1014, %v1016
        %v1018 = vsel %vm238, %v1016, %v1014
        %1019 = vrot.lane.b32.xlu0 %v816, 127
        %v1020 = vpop.permute.xlu0 %1019
        %1021 = vrot.lane.b32.xlu0 %v817, 127
        %v1022 = vpop.permute.xlu0 %1021
        %v1023 = vsel %vm245, %v1020, %v1022
        %v1024 = vsel %vm245, %v1022, %v1020
        %v1025 = vsel %vm250, %v1023, %v1018
        %v1026 = vsel %vm251, %v1024, %v1017
        %v1027 = vsel %vm256, %v1018, %v1023
        %v1028 = vsel %vm257, %v1017, %v1024
        %s1029 = scalar_lea.vmem %s2, 6
        %v1030 = vld [vmem:[%s1029] sm:$0x3]
        %v1031 = vpack.c.bf16 %v1025, %v1025
        %v1032 = vpack.c.bf16 %v1026, %v1026
        %v1034 = vsel %vm267, %v1030, 0
        %v1037 = vsel %vm271, %v1031, 0
        %v1040 = vsel %vm271, %v1032, 0
        %1042 = vmatprep.subr.bf16.mxu0 %v1040
        %1043 = vmatpush1.bf16.msra.mxu0 %v1037
        %1044 = vmatprep.subr.bf16.mxu0 0
        %1045 = vmatpush1.bf16.msra.mxu0 0
        %1046 = vmatprep.subr.bf16.mxu0 0
        %1047 = vmatpush1.bf16.msra.mxu0 0
        %1048 = vmatprep.subr.bf16.mxu0 0
        %1049 = vmatpush1.bf16.msra.mxu0 0
        %1050 = vmatprep.subr.bf16.mxu0 0
        %1051 = vmatpush1.bf16.msra.mxu0 0
        %1052 = vmatprep.subr.bf16.mxu0 0
        %1053 = vmatpush1.bf16.msra.mxu0 0
        %1054 = vmatprep.subr.bf16.mxu0 0
        %1055 = vmatpush1.bf16.msra.mxu0 0
        %1056 = vmatprep.subr.bf16.mxu0 0
        %1057 = vmatpush1.bf16.msra.mxu0 0
        %1058 = vmatprep.subr.bf16.mxu0 0
        %1059 = vmatpush1.bf16.msra.mxu0 0
        %1060 = vmatprep.subr.bf16.mxu0 0
        %1061 = vmatpush1.bf16.msra.mxu0 0
        %1062 = vmatprep.subr.bf16.mxu0 0
        %1063 = vmatpush1.bf16.msra.mxu0 0
        %1064 = vmatprep.subr.bf16.mxu0 0
        %1065 = vmatpush1.bf16.msra.mxu0 0
        %1066 = vmatprep.subr.bf16.mxu0 0
        %1067 = vmatpush1.bf16.msra.mxu0 0
        %1068 = vmatprep.subr.bf16.mxu0 0
        %1069 = vmatpush1.bf16.msra.mxu0 0
        %1070 = vmatprep.subr.bf16.mxu0 0
        %1071 = vmatpush1.bf16.msra.mxu0 0
        %1072 = vmatprep.subr.bf16.mxu0 0
        %1073 = vmatpush1.bf16.msra.mxu0 0
        %1074 = vmatprep.mubr.bf16.mxu0 0
        %1075 = vmatmul.mubr.bf16.gmra.mrb[0].mxu0 %v1034
        %v1076 = vpop.f32.mrb[0].mxu0
        %v1077 = vadd.f32 0.0, %v1076
        %v1078 = vpop.f32.mrb[0].mxu0
        %v1079 = vadd.f32 0.0, %v1078
        %v1080 = vpop.f32.mrb[0].mxu0
        %v1081 = vpop.f32.mrb[0].mxu0
        %1082 = vdwg.mxu0
        %v1083 = vadd.f32 %v1011, %v1077
        %v1084 = vadd.f32 %v1012, %v1079
        %s1085 = scalar_lea.vmem %s2, 8
        %v1086 = vld [vmem:[%s1085] sm:$0x3]
        %v1087 = vpack.c.bf16 %v816, %v816
        %v1088 = vpack.c.bf16 %v817, %v817
        %v1090 = vsel %vm267, %v1086, 0
        %v1093 = vsel %vm271, %v1087, 0
        %v1096 = vsel %vm271, %v1088, 0
        %1098 = vmatprep.subr.bf16.mxu0 %v1096
        %1099 = vmatpush1.bf16.msra.mxu0 %v1093
        %1100 = vmatprep.subr.bf16.mxu0 0
        %1101 = vmatpush1.bf16.msra.mxu0 0
        %1102 = vmatprep.subr.bf16.mxu0 0
        %1103 = vmatpush1.bf16.msra.mxu0 0
        %1104 = vmatprep.subr.bf16.mxu0 0
        %1105 = vmatpush1.bf16.msra.mxu0 0
        %1106 = vmatprep.subr.bf16.mxu0 0
        %1107 = vmatpush1.bf16.msra.mxu0 0
        %1108 = vmatprep.subr.bf16.mxu0 0
        %1109 = vmatpush1.bf16.msra.mxu0 0
        %1110 = vmatprep.subr.bf16.mxu0 0
        %1111 = vmatpush1.bf16.msra.mxu0 0
        %1112 = vmatprep.subr.bf16.mxu0 0
        %1113 = vmatpush1.bf16.msra.mxu0 0
        %1114 = vmatprep.subr.bf16.mxu0 0
        %1115 = vmatpush1.bf16.msra.mxu0 0
        %1116 = vmatprep.subr.bf16.mxu0 0
        %1117 = vmatpush1.bf16.msra.mxu0 0
        %1118 = vmatprep.subr.bf16.mxu0 0
        %1119 = vmatpush1.bf16.msra.mxu0 0
        %1120 = vmatprep.subr.bf16.mxu0 0
        %1121 = vmatpush1.bf16.msra.mxu0 0
        %1122 = vmatprep.subr.bf16.mxu0 0
        %1123 = vmatpush1.bf16.msra.mxu0 0
        %1124 = vmatprep.subr.bf16.mxu0 0
        %1125 = vmatpush1.bf16.msra.mxu0 0
        %1126 = vmatprep.subr.bf16.mxu0 0
        %1127 = vmatpush1.bf16.msra.mxu0 0
        %1128 = vmatprep.subr.bf16.mxu0 0
        %1129 = vmatpush1.bf16.msra.mxu0 0
        %1130 = vmatprep.mubr.bf16.mxu0 0
        %1131 = vmatmul.mubr.bf16.gmra.mrb[0].mxu0 %v1090
        %v1132 = vpop.f32.mrb[0].mxu0
        %v1133 = vadd.f32 0.0, %v1132
        %v1134 = vpop.f32.mrb[0].mxu0
        %v1135 = vadd.f32 0.0, %v1134
        %v1136 = vpop.f32.mrb[0].mxu0
        %v1137 = vpop.f32.mrb[0].mxu0
        %1138 = vdwg.mxu0
        %v1139 = vadd.f32 %v1083, %v1133
        %v1140 = vadd.f32 %v1084, %v1135
        %s1141 = scalar_lea.vmem %s2, 10
        %v1142 = vld [vmem:[%s1141] sm:$0x3]
        %v1143 = vpack.c.bf16 %v1027, %v1027
        %v1144 = vpack.c.bf16 %v1028, %v1028
        %v1146 = vsel %vm267, %v1142, 0
        %v1149 = vsel %vm271, %v1143, 0
        %v1152 = vsel %vm271, %v1144, 0
        %1154 = vmatprep.subr.bf16.mxu0 %v1152
        %1155 = vmatpush1.bf16.msra.mxu0 %v1149
        %1156 = vmatprep.subr.bf16.mxu0 0
        %1157 = vmatpush1.bf16.msra.mxu0 0
        %1158 = vmatprep.subr.bf16.mxu0 0
        %1159 = vmatpush1.bf16.msra.mxu0 0
        %1160 = vmatprep.subr.bf16.mxu0 0
        %1161 = vmatpush1.bf16.msra.mxu0 0
        %1162 = vmatprep.subr.bf16.mxu0 0
        %1163 = vmatpush1.bf16.msra.mxu0 0
        %1164 = vmatprep.subr.bf16.mxu0 0
        %1165 = vmatpush1.bf16.msra.mxu0 0
        %1166 = vmatprep.subr.bf16.mxu0 0
        %1167 = vmatpush1.bf16.msra.mxu0 0
        %1168 = vmatprep.subr.bf16.mxu0 0
        %1169 = vmatpush1.bf16.msra.mxu0 0
        %1170 = vmatprep.subr.bf16.mxu0 0
        %1171 = vmatpush1.bf16.msra.mxu0 0
        %1172 = vmatprep.subr.bf16.mxu0 0
        %1173 = vmatpush1.bf16.msra.mxu0 0
        %1174 = vmatprep.subr.bf16.mxu0 0
        %1175 = vmatpush1.bf16.msra.mxu0 0
        %1176 = vmatprep.subr.bf16.mxu0 0
        %1177 = vmatpush1.bf16.msra.mxu0 0
        %1178 = vmatprep.subr.bf16.mxu0 0
        %1179 = vmatpush1.bf16.msra.mxu0 0
        %1180 = vmatprep.subr.bf16.mxu0 0
        %1181 = vmatpush1.bf16.msra.mxu0 0
        %1182 = vmatprep.subr.bf16.mxu0 0
        %1183 = vmatpush1.bf16.msra.mxu0 0
        %1184 = vmatprep.subr.bf16.mxu0 0
        %1185 = vmatpush1.bf16.msra.mxu0 0
        %1186 = vmatprep.mubr.bf16.mxu0 0
        %1187 = vmatmul.mubr.bf16.gmra.mrb[0].mxu0 %v1146
        %v1188 = vpop.f32.mrb[0].mxu0
        %v1189 = vadd.f32 0.0, %v1188
        %v1190 = vpop.f32.mrb[0].mxu0
        %v1191 = vadd.f32 0.0, %v1190
        %v1192 = vpop.f32.mrb[0].mxu0
        %v1193 = vpop.f32.mrb[0].mxu0
        %1194 = vdwg.mxu0
        %v1195 = vadd.f32 %v1139, %v1189
        %v1196 = vadd.f32 %v1140, %v1191
        %1197 = vrot.lane.b32.xlu0 %v832, 1
        %v1198 = vpop.permute.xlu0 %1197
        %1199 = vrot.lane.b32.xlu0 %v833, 1
        %v1200 = vpop.permute.xlu0 %1199
        %v1201 = vsel %vm238, %v1198, %v1200
        %v1202 = vsel %vm238, %v1200, %v1198
        %1203 = vrot.lane.b32.xlu0 %v832, 127
        %v1204 = vpop.permute.xlu0 %1203
        %1205 = vrot.lane.b32.xlu0 %v833, 127
        %v1206 = vpop.permute.xlu0 %1205
        %v1207 = vsel %vm245, %v1204, %v1206
        %v1208 = vsel %vm245, %v1206, %v1204
        %v1209 = vsel %vm250, %v1207, %v1202
        %v1210 = vsel %vm251, %v1208, %v1201
        %v1211 = vsel %vm256, %v1202, %v1207
        %v1212 = vsel %vm257, %v1201, %v1208
        %s1213 = scalar_lea.vmem %s2, 12
        %v1214 = vld [vmem:[%s1213] sm:$0x3]
        %v1215 = vpack.c.bf16 %v1209, %v1209
        %v1216 = vpack.c.bf16 %v1210, %v1210
        %v1218 = vsel %vm267, %v1214, 0
        %v1221 = vsel %vm271, %v1215, 0
        %v1224 = vsel %vm271, %v1216, 0
        %1226 = vmatprep.subr.bf16.mxu0 %v1224
        %1227 = vmatpush1.bf16.msra.mxu0 %v1221
        %1228 = vmatprep.subr.bf16.mxu0 0
        %1229 = vmatpush1.bf16.msra.mxu0 0
        %1230 = vmatprep.subr.bf16.mxu0 0
        %1231 = vmatpush1.bf16.msra.mxu0 0
        %1232 = vmatprep.subr.bf16.mxu0 0
        %1233 = vmatpush1.bf16.msra.mxu0 0
        %1234 = vmatprep.subr.bf16.mxu0 0
        %1235 = vmatpush1.bf16.msra.mxu0 0
        %1236 = vmatprep.subr.bf16.mxu0 0
        %1237 = vmatpush1.bf16.msra.mxu0 0
        %1238 = vmatprep.subr.bf16.mxu0 0
        %1239 = vmatpush1.bf16.msra.mxu0 0
        %1240 = vmatprep.subr.bf16.mxu0 0
        %1241 = vmatpush1.bf16.msra.mxu0 0
        %1242 = vmatprep.subr.bf16.mxu0 0
        %1243 = vmatpush1.bf16.msra.mxu0 0
        %1244 = vmatprep.subr.bf16.mxu0 0
        %1245 = vmatpush1.bf16.msra.mxu0 0
        %1246 = vmatprep.subr.bf16.mxu0 0
        %1247 = vmatpush1.bf16.msra.mxu0 0
        %1248 = vmatprep.subr.bf16.mxu0 0
        %1249 = vmatpush1.bf16.msra.mxu0 0
        %1250 = vmatprep.subr.bf16.mxu0 0
        %1251 = vmatpush1.bf16.msra.mxu0 0
        %1252 = vmatprep.subr.bf16.mxu0 0
        %1253 = vmatpush1.bf16.msra.mxu0 0
        %1254 = vmatprep.subr.bf16.mxu0 0
        %1255 = vmatpush1.bf16.msra.mxu0 0
        %1256 = vmatprep.subr.bf16.mxu0 0
        %1257 = vmatpush1.bf16.msra.mxu0 0
        %1258 = vmatprep.mubr.bf16.mxu0 0
        %1259 = vmatmul.mubr.bf16.gmra.mrb[0].mxu0 %v1218
        %v1260 = vpop.f32.mrb[0].mxu0
        %v1261 = vadd.f32 0.0, %v1260
        %v1262 = vpop.f32.mrb[0].mxu0
        %v1263 = vadd.f32 0.0, %v1262
        %v1264 = vpop.f32.mrb[0].mxu0
        %v1265 = vpop.f32.mrb[0].mxu0
        %1266 = vdwg.mxu0
        %v1267 = vadd.f32 %v1195, %v1261
        %v1268 = vadd.f32 %v1196, %v1263
        %s1269 = scalar_lea.vmem %s2, 14
        %v1270 = vld [vmem:[%s1269] sm:$0x3]
        %v1271 = vpack.c.bf16 %v832, %v832
        %v1272 = vpack.c.bf16 %v833, %v833
        %v1274 = vsel %vm267, %v1270, 0
        %v1277 = vsel %vm271, %v1271, 0
        %v1280 = vsel %vm271, %v1272, 0
        %1282 = vmatprep.subr.bf16.mxu0 %v1280
        %1283 = vmatpush1.bf16.msra.mxu0 %v1277
        %1284 = vmatprep.subr.bf16.mxu0 0
        %1285 = vmatpush1.bf16.msra.mxu0 0
        %1286 = vmatprep.subr.bf16.mxu0 0
        %1287 = vmatpush1.bf16.msra.mxu0 0
        %1288 = vmatprep.subr.bf16.mxu0 0
        %1289 = vmatpush1.bf16.msra.mxu0 0
        %1290 = vmatprep.subr.bf16.mxu0 0
        %1291 = vmatpush1.bf16.msra.mxu0 0
        %1292 = vmatprep.subr.bf16.mxu0 0
        %1293 = vmatpush1.bf16.msra.mxu0 0
        %1294 = vmatprep.subr.bf16.mxu0 0
        %1295 = vmatpush1.bf16.msra.mxu0 0
        %1296 = vmatprep.subr.bf16.mxu0 0
        %1297 = vmatpush1.bf16.msra.mxu0 0
        %1298 = vmatprep.subr.bf16.mxu0 0
        %1299 = vmatpush1.bf16.msra.mxu0 0
        %1300 = vmatprep.subr.bf16.mxu0 0
        %1301 = vmatpush1.bf16.msra.mxu0 0
        %1302 = vmatprep.subr.bf16.mxu0 0
        %1303 = vmatpush1.bf16.msra.mxu0 0
        %1304 = vmatprep.subr.bf16.mxu0 0
        %1305 = vmatpush1.bf16.msra.mxu0 0
        %1306 = vmatprep.subr.bf16.mxu0 0
        %1307 = vmatpush1.bf16.msra.mxu0 0
        %1308 = vmatprep.subr.bf16.mxu0 0
        %1309 = vmatpush1.bf16.msra.mxu0 0
        %1310 = vmatprep.subr.bf16.mxu0 0
        %1311 = vmatpush1.bf16.msra.mxu0 0
        %1312 = vmatprep.subr.bf16.mxu0 0
        %1313 = vmatpush1.bf16.msra.mxu0 0
        %1314 = vmatprep.mubr.bf16.mxu0 0
        %1315 = vmatmul.mubr.bf16.gmra.mrb[0].mxu0 %v1274
        %v1316 = vpop.f32.mrb[0].mxu0
        %v1317 = vadd.f32 0.0, %v1316
        %v1318 = vpop.f32.mrb[0].mxu0
        %v1319 = vadd.f32 0.0, %v1318
        %v1320 = vpop.f32.mrb[0].mxu0
        %v1321 = vpop.f32.mrb[0].mxu0
        %1322 = vdwg.mxu0
        %v1323 = vadd.f32 %v1267, %v1317
        %v1324 = vadd.f32 %v1268, %v1319
        %s1325 = scalar_lea.vmem %s2, 16
        %v1326 = vld [vmem:[%s1325] sm:$0x3]
        %v1327 = vpack.c.bf16 %v1211, %v1211
        %v1328 = vpack.c.bf16 %v1212, %v1212
        %v1330 = vsel %vm267, %v1326, 0
        %v1333 = vsel %vm271, %v1327, 0
        %v1336 = vsel %vm271, %v1328, 0
        %1338 = vmatprep.subr.bf16.mxu0 %v1336
        %1339 = vmatpush1.bf16.msra.mxu0 %v1333
        %1340 = vmatprep.subr.bf16.mxu0 0
        %1341 = vmatpush1.bf16.msra.mxu0 0
        %1342 = vmatprep.subr.bf16.mxu0 0
        %1343 = vmatpush1.bf16.msra.mxu0 0
        %1344 = vmatprep.subr.bf16.mxu0 0
        %1345 = vmatpush1.bf16.msra.mxu0 0
        %1346 = vmatprep.subr.bf16.mxu0 0
        %1347 = vmatpush1.bf16.msra.mxu0 0
        %1348 = vmatprep.subr.bf16.mxu0 0
        %1349 = vmatpush1.bf16.msra.mxu0 0
        %1350 = vmatprep.subr.bf16.mxu0 0
        %1351 = vmatpush1.bf16.msra.mxu0 0
        %1352 = vmatprep.subr.bf16.mxu0 0
        %1353 = vmatpush1.bf16.msra.mxu0 0
        %1354 = vmatprep.subr.bf16.mxu0 0
        %1355 = vmatpush1.bf16.msra.mxu0 0
        %1356 = vmatprep.subr.bf16.mxu0 0
        %1357 = vmatpush1.bf16.msra.mxu0 0
        %1358 = vmatprep.subr.bf16.mxu0 0
        %1359 = vmatpush1.bf16.msra.mxu0 0
        %1360 = vmatprep.subr.bf16.mxu0 0
        %1361 = vmatpush1.bf16.msra.mxu0 0
        %1362 = vmatprep.subr.bf16.mxu0 0
        %1363 = vmatpush1.bf16.msra.mxu0 0
        %1364 = vmatprep.subr.bf16.mxu0 0
        %1365 = vmatpush1.bf16.msra.mxu0 0
        %1366 = vmatprep.subr.bf16.mxu0 0
        %1367 = vmatpush1.bf16.msra.mxu0 0
        %1368 = vmatprep.subr.bf16.mxu0 0
        %1369 = vmatpush1.bf16.msra.mxu0 0
        %1370 = vmatprep.mubr.bf16.mxu0 0
        %1371 = vmatmul.mubr.bf16.gmra.mrb[0].mxu0 %v1330
        %v1372 = vpop.f32.mrb[0].mxu0
        %v1373 = vadd.f32 0.0, %v1372
        %v1374 = vpop.f32.mrb[0].mxu0
        %v1375 = vadd.f32 0.0, %v1374
        %v1376 = vpop.f32.mrb[0].mxu0
        %v1377 = vpop.f32.mrb[0].mxu0
        %1378 = vdwg.mxu0
        %v1379 = vadd.f32 %v1323, %v1373
        %v1380 = vadd.f32 %v1324, %v1375
        %v1381 = vsel %vm793, %v1379, 0.0
        %v1382 = vsel %vm793, %v1380, 0.0
        %v1383 = vadd.f32 %v1381, %v1382
        %1384 = vadd.xlane.f32.xlu0 %v1383
        %v1385 = vpop.xlane.xlu0 %1384
        %v1386 = vmul.f32 %v1385, 0.00390625
        %v1387 = vmul.f32 %v1379, %v1379
        %v1388 = vmul.f32 %v1380, %v1380
        %v1389 = vsel %vm793, %v1387, 0.0
        %v1390 = vsel %vm793, %v1388, 0.0
        %v1391 = vadd.f32 %v1389, %v1390
        %1392 = vadd.xlane.f32.xlu0 %v1391
        %v1393 = vpop.xlane.xlu0 %1392
        %v1394 = vmul.f32 %v1393, 0.00390625
        %v1395 = vmul.f32 %v1386, %v1386
        %v1396 = vsub.f32 %v1394, %v1395
        %v1397 = vsub.f32 %v1379, %v1386
        %v1398 = vsub.f32 %v1380, %v1386
        %v1399 = vadd.f32 %v1396, 1e-05
        %v1400 = vrsqrt.pop %v1399
        %v1401 = vmul.f32 %v1397, %v1400
        %v1402 = vmul.f32 %v1398, %v1400
        %v1405 = vcombine.low %v1401, %v1402
        %v1407 = vadd.f32 %v205, %v1405
        %1408 = vst [vmem:[%s163] sm:$0xff] %v1407
        %s1409 = sand.u32 %s93, 1
        %s1410 = scalar_lea.sflag [#allocation3], %s1409
        %s1411 = sand.u32 %s93, 1
        %s1412 = smul.addr %s1411, 8
        %s1413 = scalar_lea.vmem [#allocation2], %s1412
        // Predicated region
        $region33: #{tpu_custom_call.1} parent=31 // pred_check
          %p1414 = pneg %p103
        $region34: #{tpu_custom_call.1} parent=31 // pred_check_branch
          %1416 = sbr.rel (%p1414) target = $region36
        $region35: #{tpu_custom_call.1} parent=31 // pred_region
          %s1418 = ssub.s32 128, 128
          %1419 = vsyncadd %s1410, %s1418
          %s1420 = smul.addr %s17, 2
          %s1421 = smul.addr %s1420, 64
          %s1422 = scalar_lea.hbm %s3, %s1421
          %s1424 = sshll.u32 %s1413, 4
          %s1425 = int_to_ptr.vmem [resolvable:$true] %s1424
          %1427 = dma.vmem_to_hbm [thread:$0]  %s1425, 128, %s1422, %s1410
        $region36: #{tpu_custom_call.1} parent=31 // pred_fallthru
          _
      $region32: #{tpu_custom_call.1} parent=5 // pred_fallthru
        _
      %p1428 = scmp.le.s32.totalorder 2, %s12
      // Predicated region
      $region37: #{tpu_custom_call.1} parent=5 // pred_check
        %p1429 = pneg %p1428
      $region38: #{tpu_custom_call.1} parent=5 // pred_check_branch
        %1431 = sbr.rel (%p1429) target = $region40
      $region39: #{tpu_custom_call.1} parent=5 // pred_region
        %s1432 = ssub.s32 %s12, 2
        // Predicated region
        $region41: #{tpu_custom_call.1} parent=39 // pred_check
          %p1433 = pneg %p109
        $region42: #{tpu_custom_call.1} parent=39 // pred_check_branch
          %1435 = sbr.rel (%p1433) target = $region44
        $region43: #{tpu_custom_call.1} parent=39 // pred_region
          %s1436 = sand.u32 %s94, 1
          %s1437 = scalar_lea.sflag [#allocation3], %s1436
          %s1438 = sand.u32 %s94, 1
          %s1439 = smul.addr %s1438, 8
          %s1440 = scalar_lea.vmem [#allocation2], %s1439
          %1441 = dma.done %s1437, 128
        $region44: #{tpu_custom_call.1} parent=39 // pred_fallthru
          _
      $region40: #{tpu_custom_call.1} parent=5 // pred_fallthru
        _
    $region6: #{tpu_custom_call.1} parent=1 // loop_footer
      %s16 = sadd.s32 1, %s12
    $region7: #{tpu_custom_call.1} parent=1 // loop_footer_branch
      %11 = sbr.rel target = $region3
    $region8: #{tpu_custom_call.1} parent=1 // loop_exit
      _
    %1442 = vsyncpa [#allocation3], 1
    %s1443 = scalar_lea.sflag [#allocation3], 1
    %1444 = vsyncpa %s1443, 1

</llo_original>
